<compile_context>
chip_gen: v7x
topology: tpu7x:2x2x1
jax: 0.10.0
libtpu: 0.0.40
codegen_flags: <defaults>
</compile_context>

<pallas_src>
import jax
import jax.numpy as jnp
import numpy as np
from jax.experimental import pallas as pl
from jax.experimental.pallas import tpu as pltpu


# --------------------------------- kernel ------------------------------------
def _composite_loss_kernel(background_weight):
    bw = float(background_weight)

    def kernel(x_int_ref, t_int_ref, x_reg_ref, t_reg_ref,
               x_spread_ref, x_scale_ref, t_scale_ref, sigma_ref,
               out_ref,
               acc_bce, acc_bcnt, acc_reg, acc_rcnt, acc_scl):
        h = pl.program_id(2)

        @pl.when(h == 0)
        def _init():
            for r in (acc_bce, acc_bcnt, acc_reg, acc_rcnt, acc_scl):
                r[...] = jnp.zeros_like(r)

        f32 = jnp.float32
        x_int = x_int_ref[...].astype(f32)             # (K,   S, 128)
        t_int = t_int_ref[...].astype(f32)             # (K+1, S, 128)
        K = x_int.shape[0]
        t_fg = t_int[:K]                               # target_intensity[:, :-1]

        # bce_masks = sum over all target channels (incl. background) > 0.5
        bce_mask = (jnp.sum(t_int, axis=0) > 0.5).astype(f32)     # (S, 128)

        # stable binary_cross_entropy_with_logits; z = exp(-|x|) in (0, 1] so
        # log(1 + z) is accurate enough (tiny-z regime is dominated by max(x,0))
        bce = (jnp.maximum(x_int, 0.0) - x_int * t_fg
               + jnp.log(1.0 + jnp.exp(-jnp.abs(x_int))))
        if bw != 1.0:          # background-weight path specialized out (default 1.0)
            bce = bce * jnp.where(t_fg == 0.0, bw, 1.0)
        acc_bce[...] += jnp.sum(bce, axis=0) * bce_mask
        acc_bcnt[...] += bce_mask

        # regression mask: foreground intensity target > 0.5
        reg_mask = (t_fg > 0.5).astype(f32)            # (K, S, 128)
        acc_rcnt[...] += jnp.sum(reg_mask, axis=0)

        # laplace regression loss: 0.694 + logb + ||x - t|| * exp(-logb)
        x_reg = x_reg_ref[...].astype(f32)             # (K, 2, S, 128)
        t_reg = t_reg_ref[...].astype(f32)
        d1 = x_reg[:, 0] - t_reg[:, 0]                 # free leading-plane selects
        d2 = x_reg[:, 1] - t_reg[:, 1]
        norm = jnp.sqrt(d1 * d1 + d2 * d2)
        logb = x_spread_ref[...].astype(f32)
        lap = (0.694 + logb + norm * jnp.exp(-logb)) * reg_mask
        acc_reg[...] += jnp.sum(lap, axis=0)

        # scale loss: L1(x_scale, target_scale * sigma) summed over reg_mask
        sig = sigma_ref[...].astype(f32)               # (K, 1, 1) broadcast
        sdiff = jnp.abs(x_scale_ref[...].astype(f32)
                        - t_scale_ref[...].astype(f32) * sig) * reg_mask
        acc_scl[...] += jnp.sum(sdiff, axis=0)

        # final cross-lane/sublane reduce + lane packing, once per (b, chunk)
        @pl.when(h == pl.num_programs(2) - 1)
        def _fin():
            lane = jax.lax.broadcasted_iota(jnp.int32, out_ref.shape, 1)
            vals = (jnp.where(lane == 0, jnp.sum(acc_bce[...]), 0.0)
                    + jnp.where(lane == 1, jnp.sum(acc_bcnt[...]), 0.0)
                    + jnp.where(lane == 2, jnp.sum(acc_reg[...]), 0.0)
                    + jnp.where(lane == 3, jnp.sum(acc_rcnt[...]), 0.0)
                    + jnp.where(lane == 4, jnp.sum(acc_scl[...]), 0.0))
            out_ref[...] = vals

    return kernel


# ----------------------------- tiling / planning ------------------------------
def _tpu_vmem_info():
    """(physical VMEM bytes, budget for the double-buffered input stream)."""
    try:
        cap = int(pltpu.get_tpu_info().vmem_capacity_bytes)
    except Exception:
        cap = 128 * 1024 * 1024
    return cap, min(cap // 2, 64 * 1024 * 1024)


def _plan_tiling(hw, batch, per_lane_bytes, stream_budget):
    """Pick (P, THW, HT, HW_pad): lane tiles are multiples of 1024 lanes."""
    # second 'parallel' axis keeps both v7x TensorCores busy at B == 1 / odd B
    P = 2 if (batch % 2 == 1 and hw >= 2048) else 1
    # biggest tile whose double-buffered input stream fits the VMEM budget
    cap = (stream_budget // (2 * per_lane_bytes)) // 1024 * 1024
    cap = int(max(1024, min(cap, 16384)))
    per_chunk = -(-hw // P)
    per_chunk = -(-per_chunk // 1024) * 1024
    thw = min(cap, per_chunk)
    ht = -(-per_chunk // thw)
    thw = -(-per_chunk // (ht * 1024)) * 1024   # rebalance to minimize padding
    hw_pad = P * ht * thw
    return P, thw, ht, hw_pad


def _make_sums_fn(background_weight):
    kernel = _composite_loss_kernel(background_weight)
    phys_vmem, stream_budget = _tpu_vmem_info()

    def sums_fn(x_intensity, x_reg, x_spread, x_scale,
                target_intensity, target_reg, target_scale, sigma_k11):
        B, K, H, W = x_intensity.shape
        K1 = target_intensity.shape[1]
        HW = H * W

        per_lane_bytes = (
            K * x_intensity.dtype.itemsize
            + K1 * target_intensity.dtype.itemsize
            + 2 * K * x_reg.dtype.itemsize
            + 2 * K * target_reg.dtype.itemsize
            + K * x_spread.dtype.itemsize
            + K * x_scale.dtype.itemsize
            + K * target_scale.dtype.itemsize)

        P, THW, HT, HW_pad = _plan_tiling(HW, B, per_lane_bytes, stream_budget)
        S_blk = THW // 128
        S_tot = HW_pad // 128

        def flat_pad(a):
            # contiguous H,W merge; zero-pad so tiles divide evenly.  Padded
            # sites have zero targets -> bce_mask = reg_mask = 0, and zero
            # (finite) predictions, so they contribute exactly 0.
            a = a.reshape(a.shape[:-2] + (HW,))
            if HW_pad != HW:
                cfg = [(0, 0)] * (a.ndim - 1) + [(0, HW_pad - HW)]
                a = jnp.pad(a, cfg)
            return a.reshape(a.shape[:-1] + (S_tot, 128))

        xi, ti = flat_pad(x_intensity), flat_pad(target_intensity)
        xr, tr = flat_pad(x_reg), flat_pad(target_reg)
        xsp, xsc, tsc = (flat_pad(x_spread), flat_pad(x_scale),
                         flat_pad(target_scale))

        def smap(b, p, h):
            return (b, 0, p * HT + h, 0)

        def rmap(b, p, h):
            return (b, 0, 0, p * HT + h, 0)

        spec_bk = pl.BlockSpec((None, K, S_blk, 128), smap)
        spec_bk1 = pl.BlockSpec((None, K1, S_blk, 128), smap)
        spec_reg = pl.BlockSpec((None, K, 2, S_blk, 128), rmap)
        spec_sig = pl.BlockSpec((K, 1, 1), lambda b, p, h: (0, 0, 0))
        out_spec = pl.BlockSpec((None, None, 8, 128), lambda b, p, h: (b, p, 0, 0))

        # scoped VMEM sized from the actual footprint (double-buffered inputs
        # + accumulators), with headroom, clamped under the physical capacity
        footprint = 2 * per_lane_bytes * THW + 5 * S_blk * 128 * 4
        vmem_limit = int(min(max(footprint * 3 // 2 + (2 << 20), 16 << 20),
                             phys_vmem - (4 << 20)))

        partials = pl.pallas_call(
            kernel,
            out_shape=jax.ShapeDtypeStruct((B, P, 8, 128), jnp.float32),
            grid_spec=pltpu.PrefetchScalarGridSpec(
                num_scalar_prefetch=0,
                grid=(B, P, HT),
                in_specs=[spec_bk, spec_bk1, spec_reg, spec_reg,
                          spec_bk, spec_bk, spec_bk, spec_sig],
                out_specs=out_spec,
                scratch_shapes=[pltpu.VMEM((S_blk, 128), jnp.float32)
                                for _ in range(5)]),
            compiler_params=pltpu.CompilerParams(
                dimension_semantics=("parallel", "parallel", "arbitrary"),
                vmem_limit_bytes=vmem_limit),
        )(xi, ti, xr, tr, xsp, xsc, tsc, sigma_k11)

        # (B, P, 8, 128) partials -> 5 global sums, one tiny reduction
        return jnp.sum(partials[:, :, 0, :5], axis=(0, 1))

    return jax.jit(sums_fn)


# --------------------------------- module ------------------------------------
class CompositeLossPallas:
    """pif-style CompositeLoss (n_vectors=1, n_scales=1) with a Pallas kernel."""
    # TODO(synk): paf-style heads (n_vectors=2, n_scales=0) and
    #             multiplicity_correction are not implemented.

    def __init__(self, head_name, regression_loss=None, *,
                 n_vectors=1, n_scales=1, sigmas=None):
        assert 'pif' in head_name
        assert n_vectors == 1 and n_scales == 1
        assert regression_loss is None      # laplace_loss only
        if sigmas is None:
            sigmas = [[1.0]]
        assert len(sigmas) == n_vectors
        self.n_vectors = n_vectors
        self.n_scales = n_scales
        self.background_weight = 1.0        # default_background_weight
        self.scales_to_kp = jnp.asarray(sigmas, dtype=jnp.float32)
        self._sums_fn = _make_sums_fn(self.background_weight)

    def __call__(self, x, t):
        assert len(x) == 1 + 2 * self.n_vectors + self.n_scales
        x_intensity, x_reg, x_spread, x_scale = x
        assert len(t) == 1 + self.n_vectors + 1
        target_intensity, target_reg, target_scale = t

        B, K = int(x_intensity.shape[0]), int(x_intensity.shape[1])
        sigma_k11 = jnp.broadcast_to(
            self.scales_to_kp[0].reshape(-1, 1, 1).astype(jnp.float32),
            (K, 1, 1))

        sums = self._sums_fn(x_intensity, x_reg, x_spread, x_scale,
                             target_intensity, target_reg, target_scale,
                             sigma_k11)
        sums = jax.block_until_ready(sums)              # single small D2H pull
        bce_sum, bce_cnt, reg_sum, reg_cnt, scale_sum = \
            np.asarray(sums, np.float64).tolist()

        # if torch.sum(bce_masks) < 1: return (None, None, None)
        if bce_cnt < 1.0:
            return (None, None, None)

        ce_loss = bce_sum / (bce_cnt * K)               # BCE 'mean' over mask
        reg_loss = (reg_sum / 1000.0 / B) if reg_cnt > 0.0 else None
        scale_loss = scale_sum / 1000.0 / B
        return [ce_loss, reg_loss, scale_loss]


# ----------------------------- reference (pure JAX) ---------------------------
def _reference_loss(x, t, sigmas, background_weight=1.0):
    x_int, x_reg, x_spread, x_scale = [a.astype(jnp.float32) for a in x]
    t_int, t_reg, t_scale = [a.astype(jnp.float32) for a in t]
    B, K = x_int.shape[0], x_int.shape[1]
    bce_m = (jnp.sum(t_int, axis=1, keepdims=True) > 0.5).astype(jnp.float32)
    t_fg = t_int[:, :-1]
    bce = (jnp.maximum(x_int, 0.0) - x_int * t_fg
           + jnp.log1p(jnp.exp(-jnp.abs(x_int))))
    w = jnp.where(t_fg == 0.0, background_weight, 1.0)
    ce = jnp.sum(bce * w * bce_m) / (jnp.sum(bce_m) * K)
    rm = (t_fg > 0.5).astype(jnp.float32)
    norm = jnp.sqrt((x_reg[:, :, 0] - t_reg[:, :, 0]) ** 2
                    + (x_reg[:, :, 1] - t_reg[:, :, 1]) ** 2)
    lap = 0.694 + x_spread + norm * jnp.exp(-x_spread)
    reg = jnp.sum(lap * rm) / 1000.0 / B
    sig = jnp.asarray(sigmas[0], jnp.float32).reshape(1, K, 1, 1)
    sc = jnp.sum(jnp.abs(x_scale - t_scale * sig) * rm) / 1000.0 / B
    return float(ce), float(reg), float(sc)


if __name__ == "__main__":
    B, K, H, W = 2, 4, 16, 16
    sigmas = [[1.0, 0.8, 1.2, 0.9]]          # one sigma per keypoint channel

    key = jax.random.PRNGKey(0)
    ks = jax.random.split(key, 8)
    x_intensity = jax.random.normal(ks[0], (B, K, H, W), jnp.float32)
    x_reg = jax.random.normal(ks[1], (B, K, 2, H, W), jnp.float32)
    x_spread = jax.random.normal(ks[2], (B, K, H, W), jnp.float32)
    x_scale = jax.random.normal(ks[3], (B, K, H, W), jnp.float32)

    target_intensity = jax.random.bernoulli(
        ks[4], 0.25, (B, K + 1, H, W)).astype(jnp.float32)
    target_reg = jax.random.normal(ks[5], (B, K, 2, H, W), jnp.float32)
    target_scale = jax.random.uniform(ks[6], (B, K, H, W), jnp.float32,
                                      0.5, 5.0)

    x = (x_intensity, x_reg, x_spread, x_scale)
    t = (target_intensity, target_reg, target_scale)

    loss_mod = CompositeLossPallas('pif17', n_vectors=1, n_scales=1,
                                   sigmas=sigmas)
    losses = loss_mod(x, t)
    assert losses[0] is not None and losses[1] is not None

    ref = _reference_loss(x, t, sigmas)
    np.testing.assert_allclose(np.asarray(losses, np.float32),
                               np.asarray(ref, np.float32),
                               rtol=2e-5, atol=1e-6)
    print("KERNEL_OK")
</pallas_src>

<mosaic_0001>
module attributes {stable_mosaic.version = 11 : i64} {
  func.func @kernel(%arg0: i32, %arg1: i32, %arg2: i32, %arg3: memref<1x4x8x128xf32, #tpu.memory_space<vmem>>, %arg4: memref<1x5x8x128xf32, #tpu.memory_space<vmem>>, %arg5: memref<1x4x2x8x128xf32, #tpu.memory_space<vmem>>, %arg6: memref<1x4x2x8x128xf32, #tpu.memory_space<vmem>>, %arg7: memref<1x4x8x128xf32, #tpu.memory_space<vmem>>, %arg8: memref<1x4x8x128xf32, #tpu.memory_space<vmem>>, %arg9: memref<1x4x8x128xf32, #tpu.memory_space<vmem>>, %arg10: memref<4x1x1xf32, #tpu.memory_space<vmem>>, %arg11: memref<1x1x8x128xf32, #tpu.memory_space<vmem>>, %arg12: memref<8x128xf32, #tpu.memory_space<vmem>>, %arg13: memref<8x128xf32, #tpu.memory_space<vmem>>, %arg14: memref<8x128xf32, #tpu.memory_space<vmem>>, %arg15: memref<8x128xf32, #tpu.memory_space<vmem>>, %arg16: memref<8x128xf32, #tpu.memory_space<vmem>>) attributes {dimension_semantics = [#tpu.dimension_semantics<parallel>, #tpu.dimension_semantics<parallel>, #tpu.dimension_semantics<arbitrary>], iteration_bounds = array<i64: 2, 1, 1>, scalar_prefetch = 0 : i64, scratch_operands = 5 : i64, tpu.core_type = #tpu.core_type<tc>, window_params = [{transform_indices = @transform_0, window_bounds = array<i64: 1, 4, 8, 128>}, {transform_indices = @transform_1, window_bounds = array<i64: 1, 5, 8, 128>}, {transform_indices = @transform_2, window_bounds = array<i64: 1, 4, 2, 8, 128>}, {transform_indices = @transform_3, window_bounds = array<i64: 1, 4, 2, 8, 128>}, {transform_indices = @transform_4, window_bounds = array<i64: 1, 4, 8, 128>}, {transform_indices = @transform_5, window_bounds = array<i64: 1, 4, 8, 128>}, {transform_indices = @transform_6, window_bounds = array<i64: 1, 4, 8, 128>}, {pipeline_mode = #tpu.pipeline_mode<synchronous>, transform_indices = @transform_7, window_bounds = array<i64: 4, 1, 1>}, {transform_indices = @transform_8, window_bounds = array<i64: 1, 1, 8, 128>}]} {
    %c0_i32 = arith.constant 0 : i32
    %0 = arith.cmpi eq, %arg2, %c0_i32 : i32
    %1 = arith.extui %0 : i1 to i32
    %c0_i32_0 = arith.constant 0 : i32
    %2 = arith.cmpi ne, %1, %c0_i32_0 : i32
    scf.if %2 {
      %cst_66 = arith.constant 0.000000e+00 : f32
      %90 = vector.broadcast %cst_66 : f32 to vector<8x128xf32>
      %c0_67 = arith.constant 0 : index
      %c0_68 = arith.constant 0 : index
      %91 = vector.load %arg12[%c0_67, %c0_68] : memref<8x128xf32, #tpu.memory_space<vmem>>, vector<8x128xf32>
      tpu.vector_store %arg12[%c0_67, %c0_68], %90 {strides = array<i32>} : memref<8x128xf32, #tpu.memory_space<vmem>>, vector<8x128xf32>,
      %cst_69 = arith.constant 0.000000e+00 : f32
      %92 = vector.broadcast %cst_69 : f32 to vector<8x128xf32>
      %c0_70 = arith.constant 0 : index
      %c0_71 = arith.constant 0 : index
      %93 = vector.load %arg13[%c0_70, %c0_71] : memref<8x128xf32, #tpu.memory_space<vmem>>, vector<8x128xf32>
      tpu.vector_store %arg13[%c0_70, %c0_71], %92 {strides = array<i32>} : memref<8x128xf32, #tpu.memory_space<vmem>>, vector<8x128xf32>,
      %cst_72 = arith.constant 0.000000e+00 : f32
      %94 = vector.broadcast %cst_72 : f32 to vector<8x128xf32>
      %c0_73 = arith.constant 0 : index
      %c0_74 = arith.constant 0 : index
      %95 = vector.load %arg14[%c0_73, %c0_74] : memref<8x128xf32, #tpu.memory_space<vmem>>, vector<8x128xf32>
      tpu.vector_store %arg14[%c0_73, %c0_74], %94 {strides = array<i32>} : memref<8x128xf32, #tpu.memory_space<vmem>>, vector<8x128xf32>,
      %cst_75 = arith.constant 0.000000e+00 : f32
      %96 = vector.broadcast %cst_75 : f32 to vector<8x128xf32>
      %c0_76 = arith.constant 0 : index
      %c0_77 = arith.constant 0 : index
      %97 = vector.load %arg15[%c0_76, %c0_77] : memref<8x128xf32, #tpu.memory_space<vmem>>, vector<8x128xf32>
      tpu.vector_store %arg15[%c0_76, %c0_77], %96 {strides = array<i32>} : memref<8x128xf32, #tpu.memory_space<vmem>>, vector<8x128xf32>,
      %cst_78 = arith.constant 0.000000e+00 : f32
      %98 = vector.broadcast %cst_78 : f32 to vector<8x128xf32>
      %c0_79 = arith.constant 0 : index
      %c0_80 = arith.constant 0 : index
      %99 = vector.load %arg16[%c0_79, %c0_80] : memref<8x128xf32, #tpu.memory_space<vmem>>, vector<8x128xf32>
      tpu.vector_store %arg16[%c0_79, %c0_80], %98 {strides = array<i32>} : memref<8x128xf32, #tpu.memory_space<vmem>>, vector<8x128xf32>,
    } else {
    }
    %c0 = arith.constant 0 : index
    %c0_1 = arith.constant 0 : index
    %c0_2 = arith.constant 0 : index
    %c0_3 = arith.constant 0 : index
    %3 = vector.load %arg3[%c0, %c0_1, %c0_2, %c0_3] : memref<1x4x8x128xf32, #tpu.memory_space<vmem>>, vector<1x4x8x128xf32>
    %4 = vector.shape_cast %3 : vector<1x4x8x128xf32> to vector<4x8x128xf32>
    %c0_4 = arith.constant 0 : index
    %c0_5 = arith.constant 0 : index
    %c0_6 = arith.constant 0 : index
    %c0_7 = arith.constant 0 : index
    %5 = vector.load %arg4[%c0_4, %c0_5, %c0_6, %c0_7] : memref<1x5x8x128xf32, #tpu.memory_space<vmem>>, vector<1x5x8x128xf32>
    %6 = vector.shape_cast %5 : vector<1x5x8x128xf32> to vector<5x8x128xf32>
    %7 = vector.extract_strided_slice %6 {offsets = [0, 0, 0], sizes = [4, 8, 128], strides = [1, 1, 1]} : vector<5x8x128xf32> to vector<4x8x128xf32>
    %cst = arith.constant dense<0.000000e+00> : vector<8x128xf32>
    %8 = vector.multi_reduction <add>, %6, %cst [0] : vector<5x8x128xf32> to vector<8x128xf32>
    %cst_8 = arith.constant 5.000000e-01 : f32
    %9 = vector.broadcast %cst_8 : f32 to vector<8x128xf32>
    %10 = arith.cmpf ogt, %8, %9 : vector<8x128xf32>
    %11 = arith.extui %10 : vector<8x128xi1> to vector<8x128xi32>
    %12 = arith.sitofp %11 : vector<8x128xi32> to vector<8x128xf32>
    %cst_9 = arith.constant 0.000000e+00 : f32
    %13 = vector.broadcast %cst_9 : f32 to vector<4x8x128xf32>
    %14 = arith.maximumf %4, %13 : vector<4x8x128xf32>
    %15 = arith.mulf %4, %7 : vector<4x8x128xf32>
    %16 = arith.subf %14, %15 : vector<4x8x128xf32>
    %17 = math.absf %4 : vector<4x8x128xf32>
    %cst_10 = arith.constant 0.000000e+00 : f32
    %18 = vector.broadcast %cst_10 : f32 to vector<4x8x128xf32>
    %19 = arith.subf %18, %17 : vector<4x8x128xf32>
    %20 = math.exp %19 : vector<4x8x128xf32>
    %cst_11 = arith.constant 1.000000e+00 : f32
    %21 = vector.broadcast %cst_11 : f32 to vector<4x8x128xf32>
    %22 = arith.addf %21, %20 : vector<4x8x128xf32>
    %23 = math.log %22 : vector<4x8x128xf32>
    %24 = arith.addf %16, %23 : vector<4x8x128xf32>
    %c0_12 = arith.constant 0 : index
    %c0_13 = arith.constant 0 : index
    %25 = vector.load %arg12[%c0_12, %c0_13] : memref<8x128xf32, #tpu.memory_space<vmem>>, vector<8x128xf32>
    %cst_14 = arith.constant dense<0.000000e+00> : vector<8x128xf32>
    %26 = vector.multi_reduction <add>, %24, %cst_14 [0] : vector<4x8x128xf32> to vector<8x128xf32>
    %27 = arith.mulf %26, %12 : vector<8x128xf32>
    %28 = arith.addf %25, %27 : vector<8x128xf32>
    %c0_15 = arith.constant 0 : index
    %c0_16 = arith.constant 0 : index
    %29 = vector.load %arg12[%c0_15, %c0_16] : memref<8x128xf32, #tpu.memory_space<vmem>>, vector<8x128xf32>
    tpu.vector_store %arg12[%c0_15, %c0_16], %28 {strides = array<i32>} : memref<8x128xf32, #tpu.memory_space<vmem>>, vector<8x128xf32>,
    %c0_17 = arith.constant 0 : index
    %c0_18 = arith.constant 0 : index
    %30 = vector.load %arg13[%c0_17, %c0_18] : memref<8x128xf32, #tpu.memory_space<vmem>>, vector<8x128xf32>
    %31 = arith.addf %30, %12 : vector<8x128xf32>
    %c0_19 = arith.constant 0 : index
    %c0_20 = arith.constant 0 : index
    %32 = vector.load %arg13[%c0_19, %c0_20] : memref<8x128xf32, #tpu.memory_space<vmem>>, vector<8x128xf32>
    tpu.vector_store %arg13[%c0_19, %c0_20], %31 {strides = array<i32>} : memref<8x128xf32, #tpu.memory_space<vmem>>, vector<8x128xf32>,
    %cst_21 = arith.constant 5.000000e-01 : f32
    %33 = vector.broadcast %cst_21 : f32 to vector<4x8x128xf32>
    %34 = arith.cmpf ogt, %7, %33 : vector<4x8x128xf32>
    %35 = arith.extui %34 : vector<4x8x128xi1> to vector<4x8x128xi32>
    %36 = arith.sitofp %35 : vector<4x8x128xi32> to vector<4x8x128xf32>
    %c0_22 = arith.constant 0 : index
    %c0_23 = arith.constant 0 : index
    %37 = vector.load %arg15[%c0_22, %c0_23] : memref<8x128xf32, #tpu.memory_space<vmem>>, vector<8x128xf32>
    %cst_24 = arith.constant dense<0.000000e+00> : vector<8x128xf32>
    %38 = vector.multi_reduction <add>, %36, %cst_24 [0] : vector<4x8x128xf32> to vector<8x128xf32>
    %39 = arith.addf %37, %38 : vector<8x128xf32>
    %c0_25 = arith.constant 0 : index
    %c0_26 = arith.constant 0 : index
    %40 = vector.load %arg15[%c0_25, %c0_26] : memref<8x128xf32, #tpu.memory_space<vmem>>, vector<8x128xf32>
    tpu.vector_store %arg15[%c0_25, %c0_26], %39 {strides = array<i32>} : memref<8x128xf32, #tpu.memory_space<vmem>>, vector<8x128xf32>,
    %c0_27 = arith.constant 0 : index
    %c0_28 = arith.constant 0 : index
    %c0_29 = arith.constant 0 : index
    %c0_30 = arith.constant 0 : index
    %c0_31 = arith.constant 0 : index
    %41 = vector.load %arg5[%c0_27, %c0_28, %c0_29, %c0_30, %c0_31] : memref<1x4x2x8x128xf32, #tpu.memory_space<vmem>>, vector<1x4x2x8x128xf32>
    %42 = vector.shape_cast %41 : vector<1x4x2x8x128xf32> to vector<4x2x8x128xf32>
    %c0_32 = arith.constant 0 : index
    %c0_33 = arith.constant 0 : index
    %c0_34 = arith.constant 0 : index
    %c0_35 = arith.constant 0 : index
    %c0_36 = arith.constant 0 : index
    %43 = vector.load %arg6[%c0_32, %c0_33, %c0_34, %c0_35, %c0_36] : memref<1x4x2x8x128xf32, #tpu.memory_space<vmem>>, vector<1x4x2x8x128xf32>
    %44 = vector.shape_cast %43 : vector<1x4x2x8x128xf32> to vector<4x2x8x128xf32>
    %45 = vector.extract_strided_slice %42 {offsets = [0, 0, 0, 0], sizes = [4, 1, 8, 128], strides = [1, 1, 1, 1]} : vector<4x2x8x128xf32> to vector<4x1x8x128xf32>
    %46 = vector.shape_cast %45 : vector<4x1x8x128xf32> to vector<4x8x128xf32>
    %47 = vector.extract_strided_slice %44 {offsets = [0, 0, 0, 0], sizes = [4, 1, 8, 128], strides = [1, 1, 1, 1]} : vector<4x2x8x128xf32> to vector<4x1x8x128xf32>
    %48 = vector.shape_cast %47 : vector<4x1x8x128xf32> to vector<4x8x128xf32>
    %49 = arith.subf %46, %48 : vector<4x8x128xf32>
    %50 = vector.extract_strided_slice %42 {offsets = [0, 1, 0, 0], sizes = [4, 1, 8, 128], strides = [1, 1, 1, 1]} : vector<4x2x8x128xf32> to vector<4x1x8x128xf32>
    %51 = vector.shape_cast %50 : vector<4x1x8x128xf32> to vector<4x8x128xf32>
    %52 = vector.extract_strided_slice %44 {offsets = [0, 1, 0, 0], sizes = [4, 1, 8, 128], strides = [1, 1, 1, 1]} : vector<4x2x8x128xf32> to vector<4x1x8x128xf32>
    %53 = vector.shape_cast %52 : vector<4x1x8x128xf32> to vector<4x8x128xf32>
    %54 = arith.subf %51, %53 : vector<4x8x128xf32>
    %55 = arith.mulf %49, %49 : vector<4x8x128xf32>
    %56 = arith.mulf %54, %54 : vector<4x8x128xf32>
    %57 = arith.addf %55, %56 : vector<4x8x128xf32>
    %58 = math.sqrt %57 : vector<4x8x128xf32>
    %c0_37 = arith.constant 0 : index
    %c0_38 = arith.constant 0 : index
    %c0_39 = arith.constant 0 : index
    %c0_40 = arith.constant 0 : index
    %59 = vector.load %arg7[%c0_37, %c0_38, %c0_39, %c0_40] : memref<1x4x8x128xf32, #tpu.memory_space<vmem>>, vector<1x4x8x128xf32>
    %60 = vector.shape_cast %59 : vector<1x4x8x128xf32> to vector<4x8x128xf32>
    %cst_41 = arith.constant 6.940000e-01 : f32
    %61 = vector.broadcast %cst_41 : f32 to vector<4x8x128xf32>
    %62 = arith.addf %61, %60 : vector<4x8x128xf32>
    %cst_42 = arith.constant 0.000000e+00 : f32
    %63 = vector.broadcast %cst_42 : f32 to vector<4x8x128xf32>
    %64 = arith.subf %63, %60 : vector<4x8x128xf32>
    %65 = math.exp %64 : vector<4x8x128xf32>
    %66 = arith.mulf %58, %65 : vector<4x8x128xf32>
    %67 = arith.addf %62, %66 : vector<4x8x128xf32>
    %68 = arith.mulf %67, %36 : vector<4x8x128xf32>
    %c0_43 = arith.constant 0 : index
    %c0_44 = arith.constant 0 : index
    %69 = vector.load %arg14[%c0_43, %c0_44] : memref<8x128xf32, #tpu.memory_space<vmem>>, vector<8x128xf32>
    %cst_45 = arith.constant dense<0.000000e+00> : vector<8x128xf32>
    %70 = vector.multi_reduction <add>, %68, %cst_45 [0] : vector<4x8x128xf32> to vector<8x128xf32>
    %71 = arith.addf %69, %70 : vector<8x128xf32>
    %c0_46 = arith.constant 0 : index
    %c0_47 = arith.constant 0 : index
    %72 = vector.load %arg14[%c0_46, %c0_47] : memref<8x128xf32, #tpu.memory_space<vmem>>, vector<8x128xf32>
    tpu.vector_store %arg14[%c0_46, %c0_47], %71 {strides = array<i32>} : memref<8x128xf32, #tpu.memory_space<vmem>>, vector<8x128xf32>,
    %c0_48 = arith.constant 0 : index
    %c0_49 = arith.constant 0 : index
    %c0_50 = arith.constant 0 : index
    %73 = vector.load %arg10[%c0_48, %c0_49, %c0_50] : memref<4x1x1xf32, #tpu.memory_space<vmem>>, vector<4x1x1xf32>
    %c0_51 = arith.constant 0 : index
    %c0_52 = arith.constant 0 : index
    %c0_53 = arith.constant 0 : index
    %c0_54 = arith.constant 0 : index
    %74 = vector.load %arg8[%c0_51, %c0_52, %c0_53, %c0_54] : memref<1x4x8x128xf32, #tpu.memory_space<vmem>>, vector<1x4x8x128xf32>
    %75 = vector.shape_cast %74 : vector<1x4x8x128xf32> to vector<4x8x128xf32>
    %c0_55 = arith.constant 0 : index
    %c0_56 = arith.constant 0 : index
    %c0_57 = arith.constant 0 : index
    %c0_58 = arith.constant 0 : index
    %76 = vector.load %arg9[%c0_55, %c0_56, %c0_57, %c0_58] : memref<1x4x8x128xf32, #tpu.memory_space<vmem>>, vector<1x4x8x128xf32>
    %77 = vector.shape_cast %76 : vector<1x4x8x128xf32> to vector<4x8x128xf32>
    %78 = vector.broadcast %73 : vector<4x1x1xf32> to vector<4x8x128xf32>
    %79 = arith.mulf %77, %78 : vector<4x8x128xf32>
    %80 = arith.subf %75, %79 : vector<4x8x128xf32>
    %81 = math.absf %80 : vector<4x8x128xf32>
    %82 = arith.mulf %81, %36 : vector<4x8x128xf32>
    %c0_59 = arith.constant 0 : index
    %c0_60 = arith.constant 0 : index
    %83 = vector.load %arg16[%c0_59, %c0_60] : memref<8x128xf32, #tpu.memory_space<vmem>>, vector<8x128xf32>
    %cst_61 = arith.constant dense<0.000000e+00> : vector<8x128xf32>
    %84 = vector.multi_reduction <add>, %82, %cst_61 [0] : vector<4x8x128xf32> to vector<8x128xf32>
    %85 = arith.addf %83, %84 : vector<8x128xf32>
    %c0_62 = arith.constant 0 : index
    %c0_63 = arith.constant 0 : index
    %86 = vector.load %arg16[%c0_62, %c0_63] : memref<8x128xf32, #tpu.memory_space<vmem>>, vector<8x128xf32>
    tpu.vector_store %arg16[%c0_62, %c0_63], %85 {strides = array<i32>} : memref<8x128xf32, #tpu.memory_space<vmem>>, vector<8x128xf32>,
    %c0_i32_64 = arith.constant 0 : i32
    %87 = arith.cmpi eq, %arg2, %c0_i32_64 : i32
    %88 = arith.extui %87 : i1 to i32
    %c0_i32_65 = arith.constant 0 : i32
    %89 = arith.cmpi ne, %88, %c0_i32_65 : i32
    scf.if %89 {
      %90 = tpu.iota {dimensions = array<i32: 1>} : vector<8x128xi32>
      %c0_i32_66 = arith.constant 0 : i32
      %91 = vector.broadcast %c0_i32_66 : i32 to vector<8x128xi32>
      %92 = arith.cmpi eq, %90, %91 : vector<8x128xi32>
      %c0_67 = arith.constant 0 : index
      %c0_68 = arith.constant 0 : index
      %93 = vector.load %arg12[%c0_67, %c0_68] : memref<8x128xf32, #tpu.memory_space<vmem>>, vector<8x128xf32>
      %94 = vector.shape_cast %93 : vector<8x128xf32> to vector<1x8x128xf32>
      %cst_69 = arith.constant dense<0.000000e+00> : vector<1xf32>
      %95 = vector.multi_reduction <add>, %94, %cst_69 [1, 2] : vector<1x8x128xf32> to vector<1xf32>
      %96 = vector.shape_cast %95 : vector<1xf32> to vector<1x1x1xf32>
      %97 = vector.extract %96[0, 0, 0] : f32 from vector<1x1x1xf32>
      %cst_70 = arith.constant 0.000000e+00 : f32
      %98 = vector.broadcast %97 : f32 to vector<8x128xf32>
      %99 = vector.broadcast %cst_70 : f32 to vector<8x128xf32>
      %100 = arith.select %92, %98, %99 : vector<8x128xi1>, vector<8x128xf32>
      %c1_i32 = arith.constant 1 : i32
      %101 = vector.broadcast %c1_i32 : i32 to vector<8x128xi32>
      %102 = arith.cmpi eq, %90, %101 : vector<8x128xi32>
      %c0_71 = arith.constant 0 : index
      %c0_72 = arith.constant 0 : index
      %103 = vector.load %arg13[%c0_71, %c0_72] : memref<8x128xf32, #tpu.memory_space<vmem>>, vector<8x128xf32>
      %104 = vector.shape_cast %103 : vector<8x128xf32> to vector<1x8x128xf32>
      %cst_73 = arith.constant dense<0.000000e+00> : vector<1xf32>
      %105 = vector.multi_reduction <add>, %104, %cst_73 [1, 2] : vector<1x8x128xf32> to vector<1xf32>
      %106 = vector.shape_cast %105 : vector<1xf32> to vector<1x1x1xf32>
      %107 = vector.extract %106[0, 0, 0] : f32 from vector<1x1x1xf32>
      %cst_74 = arith.constant 0.000000e+00 : f32
      %108 = vector.broadcast %107 : f32 to vector<8x128xf32>
      %109 = vector.broadcast %cst_74 : f32 to vector<8x128xf32>
      %110 = arith.select %102, %108, %109 : vector<8x128xi1>, vector<8x128xf32>
      %111 = arith.addf %100, %110 : vector<8x128xf32>
      %c2_i32 = arith.constant 2 : i32
      %112 = vector.broadcast %c2_i32 : i32 to vector<8x128xi32>
      %113 = arith.cmpi eq, %90, %112 : vector<8x128xi32>
      %c0_75 = arith.constant 0 : index
      %c0_76 = arith.constant 0 : index
      %114 = vector.load %arg14[%c0_75, %c0_76] : memref<8x128xf32, #tpu.memory_space<vmem>>, vector<8x128xf32>
      %115 = vector.shape_cast %114 : vector<8x128xf32> to vector<1x8x128xf32>
      %cst_77 = arith.constant dense<0.000000e+00> : vector<1xf32>
      %116 = vector.multi_reduction <add>, %115, %cst_77 [1, 2] : vector<1x8x128xf32> to vector<1xf32>
      %117 = vector.shape_cast %116 : vector<1xf32> to vector<1x1x1xf32>
      %118 = vector.extract %117[0, 0, 0] : f32 from vector<1x1x1xf32>
      %cst_78 = arith.constant 0.000000e+00 : f32
      %119 = vector.broadcast %118 : f32 to vector<8x128xf32>
      %120 = vector.broadcast %cst_78 : f32 to vector<8x128xf32>
      %121 = arith.select %113, %119, %120 : vector<8x128xi1>, vector<8x128xf32>
      %122 = arith.addf %111, %121 : vector<8x128xf32>
      %c3_i32 = arith.constant 3 : i32
      %123 = vector.broadcast %c3_i32 : i32 to vector<8x128xi32>
      %124 = arith.cmpi eq, %90, %123 : vector<8x128xi32>
      %c0_79 = arith.constant 0 : index
      %c0_80 = arith.constant 0 : index
      %125 = vector.load %arg15[%c0_79, %c0_80] : memref<8x128xf32, #tpu.memory_space<vmem>>, vector<8x128xf32>
      %126 = vector.shape_cast %125 : vector<8x128xf32> to vector<1x8x128xf32>
      %cst_81 = arith.constant dense<0.000000e+00> : vector<1xf32>
      %127 = vector.multi_reduction <add>, %126, %cst_81 [1, 2] : vector<1x8x128xf32> to vector<1xf32>
      %128 = vector.shape_cast %127 : vector<1xf32> to vector<1x1x1xf32>
      %129 = vector.extract %128[0, 0, 0] : f32 from vector<1x1x1xf32>
      %cst_82 = arith.constant 0.000000e+00 : f32
      %130 = vector.broadcast %129 : f32 to vector<8x128xf32>
      %131 = vector.broadcast %cst_82 : f32 to vector<8x128xf32>
      %132 = arith.select %124, %130, %131 : vector<8x128xi1>, vector<8x128xf32>
      %133 = arith.addf %122, %132 : vector<8x128xf32>
      %c4_i32 = arith.constant 4 : i32
      %134 = vector.broadcast %c4_i32 : i32 to vector<8x128xi32>
      %135 = arith.cmpi eq, %90, %134 : vector<8x128xi32>
      %c0_83 = arith.constant 0 : index
      %c0_84 = arith.constant 0 : index
      %136 = vector.load %arg16[%c0_83, %c0_84] : memref<8x128xf32, #tpu.memory_space<vmem>>, vector<8x128xf32>
      %137 = vector.shape_cast %136 : vector<8x128xf32> to vector<1x8x128xf32>
      %cst_85 = arith.constant dense<0.000000e+00> : vector<1xf32>
      %138 = vector.multi_reduction <add>, %137, %cst_85 [1, 2] : vector<1x8x128xf32> to vector<1xf32>
      %139 = vector.shape_cast %138 : vector<1xf32> to vector<1x1x1xf32>
      %140 = vector.extract %139[0, 0, 0] : f32 from vector<1x1x1xf32>
      %cst_86 = arith.constant 0.000000e+00 : f32
      %141 = vector.broadcast %140 : f32 to vector<8x128xf32>
      %142 = vector.broadcast %cst_86 : f32 to vector<8x128xf32>
      %143 = arith.select %135, %141, %142 : vector<8x128xi1>, vector<8x128xf32>
      %144 = arith.addf %133, %143 : vector<8x128xf32>
      %c0_87 = arith.constant 0 : index
      %c0_88 = arith.constant 0 : index
      %c0_89 = arith.constant 0 : index
      %c0_90 = arith.constant 0 : index
      %145 = vector.load %arg11[%c0_87, %c0_88, %c0_89, %c0_90] : memref<1x1x8x128xf32, #tpu.memory_space<vmem>>, vector<1x1x8x128xf32>
      %146 = vector.shape_cast %145 : vector<1x1x8x128xf32> to vector<8x128xf32>
      %147 = vector.shape_cast %144 : vector<8x128xf32> to vector<1x1x8x128xf32>
      tpu.vector_store %arg11[%c0_87, %c0_88, %c0_89, %c0_90], %147 {strides = array<i32>} : memref<1x1x8x128xf32, #tpu.memory_space<vmem>>, vector<1x1x8x128xf32>,
    } else {
    }
    return
  }
  func.func @transform_0(%arg0: i32, %arg1: i32, %arg2: i32) -> (i32, i32, i32, i32) {
    %c1_i32 = arith.constant 1 : i32
    %0 = arith.muli %arg1, %c1_i32 : i32
    %1 = arith.addi %0, %arg2 : i32
    %c0_i32 = arith.constant 0 : i32
    %c0_i32_0 = arith.constant 0 : i32
    %c0_i32_1 = arith.constant 0 : i32
    return %arg0, %c0_i32, %1, %c0_i32_0 : i32, i32, i32, i32
  }
  func.func @transform_1(%arg0: i32, %arg1: i32, %arg2: i32) -> (i32, i32, i32, i32) {
    %c1_i32 = arith.constant 1 : i32
    %0 = arith.muli %arg1, %c1_i32 : i32
    %1 = arith.addi %0, %arg2 : i32
    %c0_i32 = arith.constant 0 : i32
    %c0_i32_0 = arith.constant 0 : i32
    %c0_i32_1 = arith.constant 0 : i32
    return %arg0, %c0_i32, %1, %c0_i32_0 : i32, i32, i32, i32
  }
  func.func @transform_2(%arg0: i32, %arg1: i32, %arg2: i32) -> (i32, i32, i32, i32, i32) {
    %c1_i32 = arith.constant 1 : i32
    %0 = arith.muli %arg1, %c1_i32 : i32
    %1 = arith.addi %0, %arg2 : i32
    %c0_i32 = arith.constant 0 : i32
    %c0_i32_0 = arith.constant 0 : i32
    %c0_i32_1 = arith.constant 0 : i32
    %c0_i32_2 = arith.constant 0 : i32
    return %arg0, %c0_i32, %c0_i32_0, %1, %c0_i32_1 : i32, i32, i32, i32, i32
  }
  func.func @transform_3(%arg0: i32, %arg1: i32, %arg2: i32) -> (i32, i32, i32, i32, i32) {
    %c1_i32 = arith.constant 1 : i32
    %0 = arith.muli %arg1, %c1_i32 : i32
    %1 = arith.addi %0, %arg2 : i32
    %c0_i32 = arith.constant 0 : i32
    %c0_i32_0 = arith.constant 0 : i32
    %c0_i32_1 = arith.constant 0 : i32
    %c0_i32_2 = arith.constant 0 : i32
    return %arg0, %c0_i32, %c0_i32_0, %1, %c0_i32_1 : i32, i32, i32, i32, i32
  }
  func.func @transform_4(%arg0: i32, %arg1: i32, %arg2: i32) -> (i32, i32, i32, i32) {
    %c1_i32 = arith.constant 1 : i32
    %0 = arith.muli %arg1, %c1_i32 : i32
    %1 = arith.addi %0, %arg2 : i32
    %c0_i32 = arith.constant 0 : i32
    %c0_i32_0 = arith.constant 0 : i32
    %c0_i32_1 = arith.constant 0 : i32
    return %arg0, %c0_i32, %1, %c0_i32_0 : i32, i32, i32, i32
  }
  func.func @transform_5(%arg0: i32, %arg1: i32, %arg2: i32) -> (i32, i32, i32, i32) {
    %c1_i32 = arith.constant 1 : i32
    %0 = arith.muli %arg1, %c1_i32 : i32
    %1 = arith.addi %0, %arg2 : i32
    %c0_i32 = arith.constant 0 : i32
    %c0_i32_0 = arith.constant 0 : i32
    %c0_i32_1 = arith.constant 0 : i32
    return %arg0, %c0_i32, %1, %c0_i32_0 : i32, i32, i32, i32
  }
  func.func @transform_6(%arg0: i32, %arg1: i32, %arg2: i32) -> (i32, i32, i32, i32) {
    %c1_i32 = arith.constant 1 : i32
    %0 = arith.muli %arg1, %c1_i32 : i32
    %1 = arith.addi %0, %arg2 : i32
    %c0_i32 = arith.constant 0 : i32
    %c0_i32_0 = arith.constant 0 : i32
    %c0_i32_1 = arith.constant 0 : i32
    return %arg0, %c0_i32, %1, %c0_i32_0 : i32, i32, i32, i32
  }
  func.func @transform_7(%arg0: i32, %arg1: i32, %arg2: i32) -> (i32, i32, i32) {
    %c0_i32 = arith.constant 0 : i32
    %c0_i32_0 = arith.constant 0 : i32
    %c0_i32_1 = arith.constant 0 : i32
    %c0_i32_2 = arith.constant 0 : i32
    return %c0_i32, %c0_i32_0, %c0_i32_1 : i32, i32, i32
  }
  func.func @transform_8(%arg0: i32, %arg1: i32, %arg2: i32) -> (i32, i32, i32, i32) {
    %c0_i32 = arith.constant 0 : i32
    %c0_i32_0 = arith.constant 0 : i32
    %c0_i32_1 = arith.constant 0 : i32
    return %arg0, %arg1, %c0_i32, %c0_i32_0 : i32, i32, i32, i32
  }
}

</mosaic_0001>

<llo_original>
// kernel: sums_fn.1
$region0: #{sums_fn.1}
  #allocation0 [shape = 'u32[]', space=smem, size = 0x4, offset = 0x4, fixed_abs, tag = 'smem constant byte address 0x4 - core index']
  #allocation1 [shape = 'u32[144,128]{1,0:T(1,128)}', space=vmem, size = 0x12000, scoped, tag = 'internal scratch']
  #allocation2 [shape = 'f32[8,128]{1,0:T(8,128)}', space=vmem, size = 0x1000, scoped, tag = 'scratch operand']
  #allocation3 [shape = 'f32[8,128]{1,0:T(8,128)}', space=vmem, size = 0x1000, scoped, tag = 'scratch operand']
  #allocation4 [shape = 'f32[8,128]{1,0:T(8,128)}', space=vmem, size = 0x1000, scoped, tag = 'scratch operand']
  #allocation5 [shape = 'f32[8,128]{1,0:T(8,128)}', space=vmem, size = 0x1000, scoped, tag = 'scratch operand']
  #allocation6 [shape = 'f32[8,128]{1,0:T(8,128)}', space=vmem, size = 0x1000, scoped, tag = 'scratch operand']
  %s0 = inlined_call_operand.vmem [shape: f32[2,4,8,128], index: 0, kind: input, shape index: {}]
  %s1 = inlined_call_operand.vmem [shape: f32[2,5,8,128], index: 1, kind: input, shape index: {}]
  %s2 = inlined_call_operand.vmem [shape: f32[2,4,2,8,128], index: 2, kind: input, shape index: {}]
  %s3 = inlined_call_operand.vmem [shape: f32[2,4,2,8,128], index: 3, kind: input, shape index: {}]
  %s4 = inlined_call_operand.vmem [shape: f32[2,4,8,128], index: 4, kind: input, shape index: {}]
  %s5 = inlined_call_operand.vmem [shape: f32[2,4,8,128], index: 5, kind: input, shape index: {}]
  %s6 = inlined_call_operand.vmem [shape: f32[2,4,8,128], index: 6, kind: input, shape index: {}]
  %s7 = inlined_call_operand.vmem [shape: f32[4,1,1], index: 7, kind: input, shape index: {}]
  %s8 = inlined_call_operand.vmem [shape: f32[2,1,8,128], index: 8, kind: output, shape index: {}]
  %s9 = sld [smem:[#allocation0]]
  $region73: #{sums_fn.1} parent=0
    _
  %s11 = ssub.s32 1, %s9
  %s12 = scalar_select 0, %s11, %s9
  loop: start=0, step=1, limit=4
  $region2: #{sums_fn.1} parent=0 // loop_pre_header
    _
  $region3: #{sums_fn.1} parent=0 // loop_header
    %s14 = sphi 0, %s18
    %p15 = scmp.ge.s32.totalorder %s14, 4
    %s21 = sphi 0, %s40
    %s22 = sphi 0, %s36
    %s23 = sphi 0, %s32
    %s24 = sphi 0, %s21
    %s25 = sphi 0, %s22
    %s26 = sphi 0, %s23
    %s27 = sphi 0, %s24
    %s28 = sphi 0, %s25
    %s29 = sphi 0, %s26
    %s47 = sphi 0, %s49
    %s50 = sphi 0, %s47
    %s51 = sphi 0, %s50
    %s67 = sphi 0, %s51
    %s77 = sphi 0, %s79
    %s80 = sphi 0, %s77
    %s81 = sphi 0, %s80
    %s97 = sphi 0, %s81
    %s107 = sphi 0, %s109
    %s110 = sphi 0, %s107
    %s111 = sphi 0, %s110
    %s127 = sphi 0, %s111
    %s137 = sphi 0, %s139
    %s140 = sphi 0, %s137
    %s141 = sphi 0, %s140
    %s157 = sphi 0, %s141
    %s167 = sphi 0, %s169
    %s170 = sphi 0, %s167
    %s171 = sphi 0, %s170
    %s187 = sphi 0, %s171
    %s197 = sphi 0, %s199
    %s200 = sphi 0, %s197
    %s201 = sphi 0, %s200
    %s217 = sphi 0, %s201
    %s227 = sphi 0, %s229
    %s230 = sphi 0, %s227
    %s231 = sphi 0, %s230
    %s247 = sphi 0, %s231
    %s251 = sphi 0, %s251
    %s253 = sphi 0, %s251
    %s254 = sphi 0, %s253
    %s268 = sphi 0, %s254
    %s276 = sphi 0, %s278
    %s279 = sphi 0, %s276
    %s280 = sphi 0, %s279
    %s296 = sphi 0, %s280
  $region4: #{sums_fn.1} parent=0 // loop_header_branch
    %17 = sbr.rel (%p15) target = $region8
  $region5: #{sums_fn.1} parent=0 // loop_body
    %s19 = ssub.s32 %s14, 1
    %s20 = ssub.s32 %s14, 2
    %s30 = sadd.s32 1, %s23
    %p31 = scmp.ge.s32.totalorder %s30, 1
    %s32 = scalar_select %p31, 0, %s30
    %s33 = sadd.s32 1, %s22
    %s34 = scalar_select %p31, %s33, %s22
    %p35 = scmp.ge.s32.totalorder %s34, 1
    %s36 = scalar_select %p35, 0, %s34
    %s37 = sadd.s32 1, %s21
    %s38 = scalar_select %p35, %s37, %s21
    %p39 = scmp.ge.s32.totalorder %s38, 2
    %s40 = scalar_select %p39, 0, %s38
    %s41 = sadd.s32 %s22, %s23
    %s42 = sadd.s32 %s36, %s32
    %s43 = ssub.s32 %s21, %s40
    %s44 = ssub.s32 %s41, %s42
    %s45 = sor.u32 %s43, %s44
    %p46 = scmp.eq.s32.totalorder %s45, 0
    %s48 = sadd.s32 %s47, 1
    %s49 = scalar_select %p46, %s47, %s48
    %p52 = pneg %p46
    %p53 = scmp.eq.s32.totalorder %s14, 1
    %p54 = por %p52, %p53
    %p55 = scmp.ne.s32.totalorder %s47, %s50
    %p56 = scmp.eq.s32.totalorder %s14, 0
    %p57 = por %p55, %p56
    %p58 = scmp.ne.s32.totalorder %s47, %s50
    %p59 = scmp.eq.s32.totalorder %s19, 1
    %p60 = por %p58, %p59
    %p61 = scmp.ne.s32.totalorder %s50, %s51
    %p62 = scmp.eq.s32.totalorder %s19, 0
    %p63 = por %p61, %p62
    %p64 = scmp.ne.s32.totalorder %s50, %s51
    %p65 = scmp.eq.s32.totalorder %s20, 1
    %p66 = por %p64, %p65
    %p68 = scmp.ne.s32.totalorder %s51, %s67
    %p69 = scmp.eq.s32.totalorder %s20, 0
    %p70 = por %p68, %p69
    %s71 = sadd.s32 %s22, %s23
    %s72 = sadd.s32 %s36, %s32
    %s73 = ssub.s32 %s21, %s40
    %s74 = ssub.s32 %s71, %s72
    %s75 = sor.u32 %s73, %s74
    %p76 = scmp.eq.s32.totalorder %s75, 0
    %s78 = sadd.s32 %s77, 1
    %s79 = scalar_select %p76, %s77, %s78
    %p82 = pneg %p76
    %p83 = scmp.eq.s32.totalorder %s14, 1
    %p84 = por %p82, %p83
    %p85 = scmp.ne.s32.totalorder %s77, %s80
    %p86 = scmp.eq.s32.totalorder %s14, 0
    %p87 = por %p85, %p86
    %p88 = scmp.ne.s32.totalorder %s77, %s80
    %p89 = scmp.eq.s32.totalorder %s19, 1
    %p90 = por %p88, %p89
    %p91 = scmp.ne.s32.totalorder %s80, %s81
    %p92 = scmp.eq.s32.totalorder %s19, 0
    %p93 = por %p91, %p92
    %p94 = scmp.ne.s32.totalorder %s80, %s81
    %p95 = scmp.eq.s32.totalorder %s20, 1
    %p96 = por %p94, %p95
    %p98 = scmp.ne.s32.totalorder %s81, %s97
    %p99 = scmp.eq.s32.totalorder %s20, 0
    %p100 = por %p98, %p99
    %s101 = sadd.s32 %s22, %s23
    %s102 = sadd.s32 %s36, %s32
    %s103 = ssub.s32 %s21, %s40
    %s104 = ssub.s32 %s101, %s102
    %s105 = sor.u32 %s103, %s104
    %p106 = scmp.eq.s32.totalorder %s105, 0
    %s108 = sadd.s32 %s107, 1
    %s109 = scalar_select %p106, %s107, %s108
    %p112 = pneg %p106
    %p113 = scmp.eq.s32.totalorder %s14, 1
    %p114 = por %p112, %p113
    %p115 = scmp.ne.s32.totalorder %s107, %s110
    %p116 = scmp.eq.s32.totalorder %s14, 0
    %p117 = por %p115, %p116
    %p118 = scmp.ne.s32.totalorder %s107, %s110
    %p119 = scmp.eq.s32.totalorder %s19, 1
    %p120 = por %p118, %p119
    %p121 = scmp.ne.s32.totalorder %s110, %s111
    %p122 = scmp.eq.s32.totalorder %s19, 0
    %p123 = por %p121, %p122
    %p124 = scmp.ne.s32.totalorder %s110, %s111
    %p125 = scmp.eq.s32.totalorder %s20, 1
    %p126 = por %p124, %p125
    %p128 = scmp.ne.s32.totalorder %s111, %s127
    %p129 = scmp.eq.s32.totalorder %s20, 0
    %p130 = por %p128, %p129
    %s131 = sadd.s32 %s22, %s23
    %s132 = sadd.s32 %s36, %s32
    %s133 = ssub.s32 %s21, %s40
    %s134 = ssub.s32 %s131, %s132
    %s135 = sor.u32 %s133, %s134
    %p136 = scmp.eq.s32.totalorder %s135, 0
    %s138 = sadd.s32 %s137, 1
    %s139 = scalar_select %p136, %s137, %s138
    %p142 = pneg %p136
    %p143 = scmp.eq.s32.totalorder %s14, 1
    %p144 = por %p142, %p143
    %p145 = scmp.ne.s32.totalorder %s137, %s140
    %p146 = scmp.eq.s32.totalorder %s14, 0
    %p147 = por %p145, %p146
    %p148 = scmp.ne.s32.totalorder %s137, %s140
    %p149 = scmp.eq.s32.totalorder %s19, 1
    %p150 = por %p148, %p149
    %p151 = scmp.ne.s32.totalorder %s140, %s141
    %p152 = scmp.eq.s32.totalorder %s19, 0
    %p153 = por %p151, %p152
    %p154 = scmp.ne.s32.totalorder %s140, %s141
    %p155 = scmp.eq.s32.totalorder %s20, 1
    %p156 = por %p154, %p155
    %p158 = scmp.ne.s32.totalorder %s141, %s157
    %p159 = scmp.eq.s32.totalorder %s20, 0
    %p160 = por %p158, %p159
    %s161 = sadd.s32 %s22, %s23
    %s162 = sadd.s32 %s36, %s32
    %s163 = ssub.s32 %s21, %s40
    %s164 = ssub.s32 %s161, %s162
    %s165 = sor.u32 %s163, %s164
    %p166 = scmp.eq.s32.totalorder %s165, 0
    %s168 = sadd.s32 %s167, 1
    %s169 = scalar_select %p166, %s167, %s168
    %p172 = pneg %p166
    %p173 = scmp.eq.s32.totalorder %s14, 1
    %p174 = por %p172, %p173
    %p175 = scmp.ne.s32.totalorder %s167, %s170
    %p176 = scmp.eq.s32.totalorder %s14, 0
    %p177 = por %p175, %p176
    %p178 = scmp.ne.s32.totalorder %s167, %s170
    %p179 = scmp.eq.s32.totalorder %s19, 1
    %p180 = por %p178, %p179
    %p181 = scmp.ne.s32.totalorder %s170, %s171
    %p182 = scmp.eq.s32.totalorder %s19, 0
    %p183 = por %p181, %p182
    %p184 = scmp.ne.s32.totalorder %s170, %s171
    %p185 = scmp.eq.s32.totalorder %s20, 1
    %p186 = por %p184, %p185
    %p188 = scmp.ne.s32.totalorder %s171, %s187
    %p189 = scmp.eq.s32.totalorder %s20, 0
    %p190 = por %p188, %p189
    %s191 = sadd.s32 %s22, %s23
    %s192 = sadd.s32 %s36, %s32
    %s193 = ssub.s32 %s21, %s40
    %s194 = ssub.s32 %s191, %s192
    %s195 = sor.u32 %s193, %s194
    %p196 = scmp.eq.s32.totalorder %s195, 0
    %s198 = sadd.s32 %s197, 1
    %s199 = scalar_select %p196, %s197, %s198
    %p202 = pneg %p196
    %p203 = scmp.eq.s32.totalorder %s14, 1
    %p204 = por %p202, %p203
    %p205 = scmp.ne.s32.totalorder %s197, %s200
    %p206 = scmp.eq.s32.totalorder %s14, 0
    %p207 = por %p205, %p206
    %p208 = scmp.ne.s32.totalorder %s197, %s200
    %p209 = scmp.eq.s32.totalorder %s19, 1
    %p210 = por %p208, %p209
    %p211 = scmp.ne.s32.totalorder %s200, %s201
    %p212 = scmp.eq.s32.totalorder %s19, 0
    %p213 = por %p211, %p212
    %p214 = scmp.ne.s32.totalorder %s200, %s201
    %p215 = scmp.eq.s32.totalorder %s20, 1
    %p216 = por %p214, %p215
    %p218 = scmp.ne.s32.totalorder %s201, %s217
    %p219 = scmp.eq.s32.totalorder %s20, 0
    %p220 = por %p218, %p219
    %s221 = sadd.s32 %s22, %s23
    %s222 = sadd.s32 %s36, %s32
    %s223 = ssub.s32 %s21, %s40
    %s224 = ssub.s32 %s221, %s222
    %s225 = sor.u32 %s223, %s224
    %p226 = scmp.eq.s32.totalorder %s225, 0
    %s228 = sadd.s32 %s227, 1
    %s229 = scalar_select %p226, %s227, %s228
    %p232 = pneg %p226
    %p233 = scmp.eq.s32.totalorder %s14, 1
    %p234 = por %p232, %p233
    %p235 = scmp.ne.s32.totalorder %s227, %s230
    %p236 = scmp.eq.s32.totalorder %s14, 0
    %p237 = por %p235, %p236
    %p238 = scmp.ne.s32.totalorder %s227, %s230
    %p239 = scmp.eq.s32.totalorder %s19, 1
    %p240 = por %p238, %p239
    %p241 = scmp.ne.s32.totalorder %s230, %s231
    %p242 = scmp.eq.s32.totalorder %s19, 0
    %p243 = por %p241, %p242
    %p244 = scmp.ne.s32.totalorder %s230, %s231
    %p245 = scmp.eq.s32.totalorder %s20, 1
    %p246 = por %p244, %p245
    %p248 = scmp.ne.s32.totalorder %s231, %s247
    %p249 = scmp.eq.s32.totalorder %s20, 0
    %p250 = por %p248, %p249
    %s252 = sadd.s32 %s251, 1
    %p255 = scmp.eq.s32.totalorder %s14, 1
    %p256 = scmp.ne.s32.totalorder %s251, %s253
    %p257 = scmp.eq.s32.totalorder %s14, 0
    %p258 = por %p256, %p257
    %p259 = scmp.ne.s32.totalorder %s251, %s253
    %p260 = scmp.eq.s32.totalorder %s19, 1
    %p261 = por %p259, %p260
    %p262 = scmp.ne.s32.totalorder %s253, %s254
    %p263 = scmp.eq.s32.totalorder %s19, 0
    %p264 = por %p262, %p263
    %p265 = scmp.ne.s32.totalorder %s253, %s254
    %p266 = scmp.eq.s32.totalorder %s20, 1
    %p267 = por %p265, %p266
    %p269 = scmp.ne.s32.totalorder %s254, %s268
    %p270 = scmp.eq.s32.totalorder %s20, 0
    %p271 = por %p269, %p270
    %s272 = ssub.s32 %s21, %s40
    %s273 = ssub.s32 %s22, %s36
    %s274 = sor.u32 %s272, %s273
    %p275 = scmp.eq.s32.totalorder %s274, 0
    %s277 = sadd.s32 %s276, 1
    %s278 = scalar_select %p275, %s276, %s277
    %p281 = pneg %p275
    %p282 = scmp.eq.s32.totalorder %s14, 1
    %p283 = por %p281, %p282
    %p284 = scmp.ne.s32.totalorder %s276, %s279
    %p285 = scmp.eq.s32.totalorder %s14, 0
    %p286 = por %p284, %p285
    %p287 = scmp.ne.s32.totalorder %s276, %s279
    %p288 = scmp.eq.s32.totalorder %s19, 1
    %p289 = por %p287, %p288
    %p290 = scmp.ne.s32.totalorder %s279, %s280
    %p291 = scmp.eq.s32.totalorder %s19, 0
    %p292 = por %p290, %p291
    %p293 = scmp.ne.s32.totalorder %s279, %s280
    %p294 = scmp.eq.s32.totalorder %s20, 1
    %p295 = por %p293, %p294
    %p297 = scmp.ne.s32.totalorder %s280, %s296
    %p298 = scmp.eq.s32.totalorder %s20, 0
    %p299 = por %p297, %p298
    %p300 = scmp.le.s32.totalorder 1, %s14
    %p301 = scmp.lt.s32.totalorder %s14, 3
    %p302 = pnand %p300, %p301
    %p303 = pneg %p302
    // Predicated region
    $region9: #{sums_fn.1} parent=5 // pred_check
      _
    $region10: #{sums_fn.1} parent=5 // pred_check_branch
      %305 = sbr.rel (%p302) target = $region12
    $region11: #{sums_fn.1} parent=5 // pred_region
      %s306 = ssub.s32 %s14, 1
      // Predicated region
      $region13: #{sums_fn.1} parent=11 // pred_check
        %p307 = pneg %p264
      $region14: #{sums_fn.1} parent=11 // pred_check_branch
        %309 = sbr.rel (%p307) target = $region16
      $region15: #{sums_fn.1} parent=11 // pred_region
        _
      $region16: #{sums_fn.1} parent=11 // pred_fallthru
        _
    $region12: #{sums_fn.1} parent=5 // pred_fallthru
      _
    %p310 = scmp.lt.s32.totalorder %s14, 2
    // Predicated region
    $region17: #{sums_fn.1} parent=5 // pred_check
      %p311 = pneg %p310
    $region18: #{sums_fn.1} parent=5 // pred_check_branch
      %313 = sbr.rel (%p311) target = $region20
    $region19: #{sums_fn.1} parent=5 // pred_region
      // Predicated region
      $region21: #{sums_fn.1} parent=19 // pred_check
        %p314 = pneg %p57
      $region22: #{sums_fn.1} parent=19 // pred_check_branch
        %316 = sbr.rel (%p314) target = $region24
      $region23: #{sums_fn.1} parent=19 // pred_region
        %s317 = sadd.s32 %s22, %s23
        %p318 = scmp.lt.s32.totalorder %s21, 1
        %s319 = scalar_select %p318, %s21, 1
        %p320 = scmp.lt.s32.totalorder %s317, 0
        %s321 = scalar_select %p320, %s317, 0
        %s322 = smul.addr %s319, 4
        %s323 = sadd.s32 %s321, %s322
        %s324 = smul.addr %s323, 8
        %s325 = scalar_lea.vmem %s0, %s324
        %s326 = sadd.s32 %s22, %s23
      $region24: #{sums_fn.1} parent=19 // pred_fallthru
        _
      // Predicated region
      $region25: #{sums_fn.1} parent=19 // pred_check
        %p327 = pneg %p87
      $region26: #{sums_fn.1} parent=19 // pred_check_branch
        %329 = sbr.rel (%p327) target = $region28
      $region27: #{sums_fn.1} parent=19 // pred_region
        %s330 = sadd.s32 %s22, %s23
        %p331 = scmp.lt.s32.totalorder %s21, 1
        %s332 = scalar_select %p331, %s21, 1
        %p333 = scmp.lt.s32.totalorder %s330, 0
        %s334 = scalar_select %p333, %s330, 0
        %s335 = smul.addr %s332, 5
        %s336 = sadd.s32 %s334, %s335
        %s337 = smul.addr %s336, 8
        %s338 = scalar_lea.vmem %s1, %s337
        %s339 = sadd.s32 %s22, %s23
      $region28: #{sums_fn.1} parent=19 // pred_fallthru
        _
      // Predicated region
      $region29: #{sums_fn.1} parent=19 // pred_check
        %p340 = pneg %p117
      $region30: #{sums_fn.1} parent=19 // pred_check_branch
        %342 = sbr.rel (%p340) target = $region32
      $region31: #{sums_fn.1} parent=19 // pred_region
        %s343 = sadd.s32 %s22, %s23
        %p344 = scmp.lt.s32.totalorder %s21, 1
        %s345 = scalar_select %p344, %s21, 1
        %p346 = scmp.lt.s32.totalorder %s343, 0
        %s347 = scalar_select %p346, %s343, 0
        %s348 = smul.addr %s345, 8
        %s349 = sadd.s32 %s347, %s348
        %s350 = smul.addr %s349, 8
        %s351 = scalar_lea.vmem %s2, %s350
        %s352 = sadd.s32 %s22, %s23
      $region32: #{sums_fn.1} parent=19 // pred_fallthru
        _
      // Predicated region
      $region33: #{sums_fn.1} parent=19 // pred_check
        %p353 = pneg %p147
      $region34: #{sums_fn.1} parent=19 // pred_check_branch
        %355 = sbr.rel (%p353) target = $region36
      $region35: #{sums_fn.1} parent=19 // pred_region
        %s356 = sadd.s32 %s22, %s23
        %p357 = scmp.lt.s32.totalorder %s21, 1
        %s358 = scalar_select %p357, %s21, 1
        %p359 = scmp.lt.s32.totalorder %s356, 0
        %s360 = scalar_select %p359, %s356, 0
        %s361 = smul.addr %s358, 8
        %s362 = sadd.s32 %s360, %s361
        %s363 = smul.addr %s362, 8
        %s364 = scalar_lea.vmem %s3, %s363
        %s365 = sadd.s32 %s22, %s23
      $region36: #{sums_fn.1} parent=19 // pred_fallthru
        _
      // Predicated region
      $region37: #{sums_fn.1} parent=19 // pred_check
        %p366 = pneg %p177
      $region38: #{sums_fn.1} parent=19 // pred_check_branch
        %368 = sbr.rel (%p366) target = $region40
      $region39: #{sums_fn.1} parent=19 // pred_region
        %s369 = sadd.s32 %s22, %s23
        %p370 = scmp.lt.s32.totalorder %s21, 1
        %s371 = scalar_select %p370, %s21, 1
        %p372 = scmp.lt.s32.totalorder %s369, 0
        %s373 = scalar_select %p372, %s369, 0
        %s374 = smul.addr %s371, 4
        %s375 = sadd.s32 %s373, %s374
        %s376 = smul.addr %s375, 8
        %s377 = scalar_lea.vmem %s4, %s376
        %s378 = sadd.s32 %s22, %s23
      $region40: #{sums_fn.1} parent=19 // pred_fallthru
        _
      // Predicated region
      $region41: #{sums_fn.1} parent=19 // pred_check
        %p379 = pneg %p207
      $region42: #{sums_fn.1} parent=19 // pred_check_branch
        %381 = sbr.rel (%p379) target = $region44
      $region43: #{sums_fn.1} parent=19 // pred_region
        %s382 = sadd.s32 %s22, %s23
        %p383 = scmp.lt.s32.totalorder %s21, 1
        %s384 = scalar_select %p383, %s21, 1
        %p385 = scmp.lt.s32.totalorder %s382, 0
        %s386 = scalar_select %p385, %s382, 0
        %s387 = smul.addr %s384, 4
        %s388 = sadd.s32 %s386, %s387
        %s389 = smul.addr %s388, 8
        %s390 = scalar_lea.vmem %s5, %s389
        %s391 = sadd.s32 %s22, %s23
      $region44: #{sums_fn.1} parent=19 // pred_fallthru
        _
      // Predicated region
      $region45: #{sums_fn.1} parent=19 // pred_check
        %p392 = pneg %p237
      $region46: #{sums_fn.1} parent=19 // pred_check_branch
        %394 = sbr.rel (%p392) target = $region48
      $region47: #{sums_fn.1} parent=19 // pred_region
        %s395 = sadd.s32 %s22, %s23
        %p396 = scmp.lt.s32.totalorder %s21, 1
        %s397 = scalar_select %p396, %s21, 1
        %p398 = scmp.lt.s32.totalorder %s395, 0
        %s399 = scalar_select %p398, %s395, 0
        %s400 = smul.addr %s397, 4
        %s401 = sadd.s32 %s399, %s400
        %s402 = smul.addr %s401, 8
        %s403 = scalar_lea.vmem %s6, %s402
        %s404 = sadd.s32 %s22, %s23
      $region48: #{sums_fn.1} parent=19 // pred_fallthru
        _
    $region20: #{sums_fn.1} parent=5 // pred_fallthru
      _
    %p405 = scmp.le.s32.totalorder 1, %s14
    %p406 = scmp.lt.s32.totalorder %s14, 3
    %p407 = pnand %p405, %p406
    %p408 = pneg %p407
    // Predicated region
    $region49: #{sums_fn.1} parent=5 // pred_check
      _
    $region50: #{sums_fn.1} parent=5 // pred_check_branch
      %410 = sbr.rel (%p407) target = $region52
    $region51: #{sums_fn.1} parent=5 // pred_region
      %s411 = ssub.s32 %s14, 1
      %s412 = sadd.s32 %s25, %s26
      %p413 = scmp.lt.s32.totalorder %s24, 1
      %s414 = scalar_select %p413, %s24, 1
      %p415 = scmp.lt.s32.totalorder %s412, 0
      %s416 = scalar_select %p415, %s412, 0
      %s417 = smul.addr %s414, 4
      %s418 = sadd.s32 %s416, %s417
      %s419 = smul.addr %s418, 8
      %s420 = scalar_lea.vmem %s0, %s419
      %p421 = pneg %p63
      %p422 = pneg %p60
      %s423 = sadd.s32 %s25, %s26
      %p424 = scmp.lt.s32.totalorder %s24, 1
      %s425 = scalar_select %p424, %s24, 1
      %p426 = scmp.lt.s32.totalorder %s423, 0
      %s427 = scalar_select %p426, %s423, 0
      %s428 = smul.addr %s425, 5
      %s429 = sadd.s32 %s427, %s428
      %s430 = smul.addr %s429, 8
      %s431 = scalar_lea.vmem %s1, %s430
      %p432 = pneg %p93
      %p433 = pneg %p90
      %s434 = sadd.s32 %s25, %s26
      %p435 = scmp.lt.s32.totalorder %s24, 1
      %s436 = scalar_select %p435, %s24, 1
      %p437 = scmp.lt.s32.totalorder %s434, 0
      %s438 = scalar_select %p437, %s434, 0
      %s439 = smul.addr %s436, 8
      %s440 = sadd.s32 %s438, %s439
      %s441 = smul.addr %s440, 8
      %s442 = scalar_lea.vmem %s2, %s441
      %p443 = pneg %p123
      %p444 = pneg %p120
      %s445 = sadd.s32 %s25, %s26
      %p446 = scmp.lt.s32.totalorder %s24, 1
      %s447 = scalar_select %p446, %s24, 1
      %p448 = scmp.lt.s32.totalorder %s445, 0
      %s449 = scalar_select %p448, %s445, 0
      %s450 = smul.addr %s447, 8
      %s451 = sadd.s32 %s449, %s450
      %s452 = smul.addr %s451, 8
      %s453 = scalar_lea.vmem %s3, %s452
      %p454 = pneg %p153
      %p455 = pneg %p150
      %s456 = sadd.s32 %s25, %s26
      %p457 = scmp.lt.s32.totalorder %s24, 1
      %s458 = scalar_select %p457, %s24, 1
      %p459 = scmp.lt.s32.totalorder %s456, 0
      %s460 = scalar_select %p459, %s456, 0
      %s461 = smul.addr %s458, 4
      %s462 = sadd.s32 %s460, %s461
      %s463 = smul.addr %s462, 8
      %s464 = scalar_lea.vmem %s4, %s463
      %p465 = pneg %p183
      %p466 = pneg %p180
      %s467 = sadd.s32 %s25, %s26
      %p468 = scmp.lt.s32.totalorder %s24, 1
      %s469 = scalar_select %p468, %s24, 1
      %p470 = scmp.lt.s32.totalorder %s467, 0
      %s471 = scalar_select %p470, %s467, 0
      %s472 = smul.addr %s469, 4
      %s473 = sadd.s32 %s471, %s472
      %s474 = smul.addr %s473, 8
      %s475 = scalar_lea.vmem %s5, %s474
      %p476 = pneg %p213
      %p477 = pneg %p210
      %s478 = sadd.s32 %s25, %s26
      %p479 = scmp.lt.s32.totalorder %s24, 1
      %s480 = scalar_select %p479, %s24, 1
      %p481 = scmp.lt.s32.totalorder %s478, 0
      %s482 = scalar_select %p481, %s478, 0
      %s483 = smul.addr %s480, 4
      %s484 = sadd.s32 %s482, %s483
      %s485 = smul.addr %s484, 8
      %s486 = scalar_lea.vmem %s6, %s485
      %p487 = pneg %p243
      %p488 = pneg %p240
      %p489 = pneg %p264
      %p490 = pneg %p261
      %p491 = pneg %p292
      %p492 = pneg %p289
      %p493 = scmp.lt.s32.totalorder %s24, 1
      %s494 = scalar_select %p493, %s24, 1
      %p495 = scmp.lt.s32.totalorder %s25, 0
      %s496 = scalar_select %p495, %s25, 0
      %s497 = sadd.s32 %s496, %s494
      %s498 = smul.addr %s497, 8
      %s499 = scalar_lea.vmem %s8, %s498
      %s500 = sadd.s32 %s25, %s26
      %p501 = scmp.lt.s32.totalorder %s24, 1
      %s502 = scalar_select %p501, %s24, 1
      %p503 = scmp.lt.s32.totalorder %s500, 0
      %s504 = scalar_select %p503, %s500, 0
      %s505 = smul.addr %s502, 4
      %s506 = sadd.s32 %s504, %s505
      %s507 = smul.addr %s506, 8
      %s508 = scalar_lea.vmem %s0, %s507
      %s509 = sadd.s32 %s25, %s26
      %s510 = sadd.s32 %s25, %s26
      %p511 = scmp.lt.s32.totalorder %s24, 1
      %s512 = scalar_select %p511, %s24, 1
      %p513 = scmp.lt.s32.totalorder %s510, 0
      %s514 = scalar_select %p513, %s510, 0
      %s515 = smul.addr %s512, 5
      %s516 = sadd.s32 %s514, %s515
      %s517 = smul.addr %s516, 8
      %s518 = scalar_lea.vmem %s1, %s517
      %s519 = sadd.s32 %s25, %s26
      %s520 = sadd.s32 %s25, %s26
      %p521 = scmp.lt.s32.totalorder %s24, 1
      %s522 = scalar_select %p521, %s24, 1
      %p523 = scmp.lt.s32.totalorder %s520, 0
      %s524 = scalar_select %p523, %s520, 0
      %s525 = smul.addr %s522, 8
      %s526 = sadd.s32 %s524, %s525
      %s527 = smul.addr %s526, 8
      %s528 = scalar_lea.vmem %s2, %s527
      %s529 = sadd.s32 %s25, %s26
      %s530 = sadd.s32 %s25, %s26
      %p531 = scmp.lt.s32.totalorder %s24, 1
      %s532 = scalar_select %p531, %s24, 1
      %p533 = scmp.lt.s32.totalorder %s530, 0
      %s534 = scalar_select %p533, %s530, 0
      %s535 = smul.addr %s532, 8
      %s536 = sadd.s32 %s534, %s535
      %s537 = smul.addr %s536, 8
      %s538 = scalar_lea.vmem %s3, %s537
      %s539 = sadd.s32 %s25, %s26
      %s540 = sadd.s32 %s25, %s26
      %p541 = scmp.lt.s32.totalorder %s24, 1
      %s542 = scalar_select %p541, %s24, 1
      %p543 = scmp.lt.s32.totalorder %s540, 0
      %s544 = scalar_select %p543, %s540, 0
      %s545 = smul.addr %s542, 4
      %s546 = sadd.s32 %s544, %s545
      %s547 = smul.addr %s546, 8
      %s548 = scalar_lea.vmem %s4, %s547
      %s549 = sadd.s32 %s25, %s26
      %s550 = sadd.s32 %s25, %s26
      %p551 = scmp.lt.s32.totalorder %s24, 1
      %s552 = scalar_select %p551, %s24, 1
      %p553 = scmp.lt.s32.totalorder %s550, 0
      %s554 = scalar_select %p553, %s550, 0
      %s555 = smul.addr %s552, 4
      %s556 = sadd.s32 %s554, %s555
      %s557 = smul.addr %s556, 8
      %s558 = scalar_lea.vmem %s5, %s557
      %s559 = sadd.s32 %s25, %s26
      %s560 = sadd.s32 %s25, %s26
      %p561 = scmp.lt.s32.totalorder %s24, 1
      %s562 = scalar_select %p561, %s24, 1
      %p563 = scmp.lt.s32.totalorder %s560, 0
      %s564 = scalar_select %p563, %s560, 0
      %s565 = smul.addr %s562, 4
      %s566 = sadd.s32 %s564, %s565
      %s567 = smul.addr %s566, 8
      %s568 = scalar_lea.vmem %s6, %s567
      %s569 = sadd.s32 %s25, %s26
      %p570 = scmp.lt.s32.totalorder %s24, 1
      %s571 = scalar_select %p570, %s24, 1
      %p572 = scmp.lt.s32.totalorder %s25, 0
      %s573 = scalar_select %p572, %s25, 0
      %s574 = sadd.s32 %s573, %s571
      %s575 = smul.addr %s574, 8
      %s576 = scalar_lea.vmem %s8, %s575
      %p577 = scmp.eq.s32.totalorder %s26, 0
      // Predicated region
      $region53: #{sums_fn.1} parent=51 // pred_check
        %p578 = pneg %p577
      $region54: #{sums_fn.1} parent=51 // pred_check_branch
        %580 = sbr.rel (%p578) target = $region56
      $region55: #{sums_fn.1} parent=51 // pred_region
        %581 = vst [vmem:[#allocation2] sm:$0xff] 0.0
        %582 = vst [vmem:[#allocation3] sm:$0xff] 0.0
        %583 = vst [vmem:[#allocation4] sm:$0xff] 0.0
        %584 = vst [vmem:[#allocation5] sm:$0xff] 0.0
        %585 = vst [vmem:[#allocation6] sm:$0xff] 0.0
      $region56: #{sums_fn.1} parent=51 // pred_fallthru
        _
      %v586 = vld [vmem:[%s508] sm:$0xff]
      %v587 = vld [vmem:[%s508 + $0x8] sm:$0xff]
      %v588 = vld [vmem:[%s508 + $0x10] sm:$0xff]
      %v589 = vld [vmem:[%s508 + $0x18] sm:$0xff]
      %v590 = vld [vmem:[%s518] sm:$0xff]
      %v591 = vld [vmem:[%s518 + $0x8] sm:$0xff]
      %v592 = vld [vmem:[%s518 + $0x10] sm:$0xff]
      %v593 = vld [vmem:[%s518 + $0x18] sm:$0xff]
      %v594 = vld [vmem:[%s518 + $0x20] sm:$0xff]
      %v595 = vadd.f32 %v590, %v591
      %v596 = vadd.f32 %v595, %v592
      %v597 = vadd.f32 %v596, %v593
      %v598 = vadd.f32 %v597, %v594
      %vm599 = vcmp.gt.f32.partialorder %v598, 0.5
      %v600 = vsel %vm599, 1, 0
      %v601 = vcvt.s32.f32 %v600
      %v602 = vmax.f32 %v586, 0.0
      %v603 = vmax.f32 %v587, 0.0
      %v604 = vmax.f32 %v588, 0.0
      %v605 = vmax.f32 %v589, 0.0
      %v606 = vmul.f32 %v586, %v590
      %v607 = vmul.f32 %v587, %v591
      %v608 = vmul.f32 %v588, %v592
      %v609 = vmul.f32 %v589, %v593
      %v610 = vsub.f32 %v602, %v606
      %v611 = vsub.f32 %v603, %v607
      %v612 = vsub.f32 %v604, %v608
      %v613 = vsub.f32 %v605, %v609
      %v614 = vand.u32 2147483647, %v586
      %v615 = vand.u32 2147483647, %v587
      %v616 = vand.u32 2147483647, %v588
      %v617 = vand.u32 2147483647, %v589
      %v618 = vsub.f32 0.0, %v614
      %v619 = vsub.f32 0.0, %v615
      %v620 = vsub.f32 0.0, %v616
      %v621 = vsub.f32 0.0, %v617
      %v622 = vmul.f32 %v618, 1.442695
      %v623 = vpow.pop %v622
      %v624 = vmul.f32 %v619, 1.442695
      %v625 = vpow.pop %v624
      %v626 = vmul.f32 %v620, 1.442695
      %v627 = vpow.pop %v626
      %v628 = vmul.f32 %v621, 1.442695
      %v629 = vpow.pop %v628
      %v630 = vadd.f32 %v623, 1.0
      %v631 = vadd.f32 %v625, 1.0
      %v632 = vadd.f32 %v627, 1.0
      %v633 = vadd.f32 %v629, 1.0
      %v634 = vlog2.pop %v630
      %v635 = vmul.f32 %v634, 0.6931472
      %v636 = vlog2.pop %v631
      %v637 = vmul.f32 %v636, 0.6931472
      %v638 = vlog2.pop %v632
      %v639 = vmul.f32 %v638, 0.6931472
      %v640 = vlog2.pop %v633
      %v641 = vmul.f32 %v640, 0.6931472
      %v642 = vadd.f32 %v610, %v635
      %v643 = vadd.f32 %v611, %v637
      %v644 = vadd.f32 %v612, %v639
      %v645 = vadd.f32 %v613, %v641
      %v646 = vld [vmem:[#allocation2] sm:$0xff]
      %v647 = vadd.f32 %v642, %v643
      %v648 = vadd.f32 %v647, %v644
      %v649 = vadd.f32 %v648, %v645
      %v650 = vmul.f32 %v649, %v601
      %v651 = vadd.f32 %v646, %v650
      %652 = vst [vmem:[#allocation2] sm:$0xff] %v651
      %v653 = vld [vmem:[#allocation3] sm:$0xff]
      %v654 = vadd.f32 %v653, %v601
      %655 = vst [vmem:[#allocation3] sm:$0xff] %v654
      %vm656 = vcmp.gt.f32.partialorder %v590, 0.5
      %vm657 = vcmp.gt.f32.partialorder %v591, 0.5
      %vm658 = vcmp.gt.f32.partialorder %v592, 0.5
      %vm659 = vcmp.gt.f32.partialorder %v593, 0.5
      %v660 = vsel %vm656, 1, 0
      %v661 = vsel %vm657, 1, 0
      %v662 = vsel %vm658, 1, 0
      %v663 = vsel %vm659, 1, 0
      %v664 = vcvt.s32.f32 %v660
      %v665 = vcvt.s32.f32 %v661
      %v666 = vcvt.s32.f32 %v662
      %v667 = vcvt.s32.f32 %v663
      %v668 = vld [vmem:[#allocation5] sm:$0xff]
      %v669 = vadd.f32 %v664, %v665
      %v670 = vadd.f32 %v669, %v666
      %v671 = vadd.f32 %v670, %v667
      %v672 = vadd.f32 %v668, %v671
      %673 = vst [vmem:[#allocation5] sm:$0xff] %v672
      %v674 = vld [vmem:[%s528] sm:$0xff]
      %v675 = vld [vmem:[%s528 + $0x8] sm:$0xff]
      %v676 = vld [vmem:[%s528 + $0x10] sm:$0xff]
      %v677 = vld [vmem:[%s528 + $0x18] sm:$0xff]
      %v678 = vld [vmem:[%s528 + $0x20] sm:$0xff]
      %v679 = vld [vmem:[%s528 + $0x28] sm:$0xff]
      %v680 = vld [vmem:[%s528 + $0x30] sm:$0xff]
      %v681 = vld [vmem:[%s528 + $0x38] sm:$0xff]
      %v682 = vld [vmem:[%s538] sm:$0xff]
      %v683 = vld [vmem:[%s538 + $0x8] sm:$0xff]
      %v684 = vld [vmem:[%s538 + $0x10] sm:$0xff]
      %v685 = vld [vmem:[%s538 + $0x18] sm:$0xff]
      %v686 = vld [vmem:[%s538 + $0x20] sm:$0xff]
      %v687 = vld [vmem:[%s538 + $0x28] sm:$0xff]
      %v688 = vld [vmem:[%s538 + $0x30] sm:$0xff]
      %v689 = vld [vmem:[%s538 + $0x38] sm:$0xff]
      %v690 = vsub.f32 %v674, %v682
      %v691 = vsub.f32 %v676, %v684
      %v692 = vsub.f32 %v678, %v686
      %v693 = vsub.f32 %v680, %v688
      %v694 = vsub.f32 %v675, %v683
      %v695 = vsub.f32 %v677, %v685
      %v696 = vsub.f32 %v679, %v687
      %v697 = vsub.f32 %v681, %v689
      %v698 = vmul.f32 %v690, %v690
      %v699 = vmul.f32 %v691, %v691
      %v700 = vmul.f32 %v692, %v692
      %v701 = vmul.f32 %v693, %v693
      %v702 = vmul.f32 %v694, %v694
      %v703 = vmul.f32 %v695, %v695
      %v704 = vmul.f32 %v696, %v696
      %v705 = vmul.f32 %v697, %v697
      %v706 = vadd.f32 %v698, %v702
      %v707 = vadd.f32 %v699, %v703
      %v708 = vadd.f32 %v700, %v704
      %v709 = vadd.f32 %v701, %v705
      %v710 = vrsqrt.pop %v706
      %v711 = vmul.f32 %v706, %v710
      %vm712 = vcmp.eq.f32.partialorder %v706, inf
      %v713 = vsel %vm712, %v706, %v711
      %vm714 = vcmp.eq.f32.partialorder %v706, 0.0
      %v715 = vand.u32 %v706, 2147483648
      %v716 = vsel %vm714, %v715, %v713
      %v717 = vrsqrt.pop %v707
      %v718 = vmul.f32 %v707, %v717
      %vm719 = vcmp.eq.f32.partialorder %v707, inf
      %v720 = vsel %vm719, %v707, %v718
      %vm721 = vcmp.eq.f32.partialorder %v707, 0.0
      %v722 = vand.u32 %v707, 2147483648
      %v723 = vsel %vm721, %v722, %v720
      %v724 = vrsqrt.pop %v708
      %v725 = vmul.f32 %v708, %v724
      %vm726 = vcmp.eq.f32.partialorder %v708, inf
      %v727 = vsel %vm726, %v708, %v725
      %vm728 = vcmp.eq.f32.partialorder %v708, 0.0
      %v729 = vand.u32 %v708, 2147483648
      %v730 = vsel %vm728, %v729, %v727
      %v731 = vrsqrt.pop %v709
      %v732 = vmul.f32 %v709, %v731
      %vm733 = vcmp.eq.f32.partialorder %v709, inf
      %v734 = vsel %vm733, %v709, %v732
      %vm735 = vcmp.eq.f32.partialorder %v709, 0.0
      %v736 = vand.u32 %v709, 2147483648
      %v737 = vsel %vm735, %v736, %v734
      %v738 = vld [vmem:[%s548] sm:$0xff]
      %v739 = vld [vmem:[%s548 + $0x8] sm:$0xff]
      %v740 = vld [vmem:[%s548 + $0x10] sm:$0xff]
      %v741 = vld [vmem:[%s548 + $0x18] sm:$0xff]
      %v742 = vadd.f32 %v738, 0.694
      %v743 = vadd.f32 %v739, 0.694
      %v744 = vadd.f32 %v740, 0.694
      %v745 = vadd.f32 %v741, 0.694
      %v746 = vsub.f32 0.0, %v738
      %v747 = vsub.f32 0.0, %v739
      %v748 = vsub.f32 0.0, %v740
      %v749 = vsub.f32 0.0, %v741
      %v750 = vmul.f32 %v746, 1.442695
      %v751 = vpow.pop %v750
      %v752 = vmul.f32 %v747, 1.442695
      %v753 = vpow.pop %v752
      %v754 = vmul.f32 %v748, 1.442695
      %v755 = vpow.pop %v754
      %v756 = vmul.f32 %v749, 1.442695
      %v757 = vpow.pop %v756
      %v758 = vmul.f32 %v716, %v751
      %v759 = vmul.f32 %v723, %v753
      %v760 = vmul.f32 %v730, %v755
      %v761 = vmul.f32 %v737, %v757
      %v762 = vadd.f32 %v742, %v758
      %v763 = vadd.f32 %v743, %v759
      %v764 = vadd.f32 %v744, %v760
      %v765 = vadd.f32 %v745, %v761
      %v766 = vmul.f32 %v762, %v664
      %v767 = vmul.f32 %v763, %v665
      %v768 = vmul.f32 %v764, %v666
      %v769 = vmul.f32 %v765, %v667
      %v770 = vld [vmem:[#allocation4] sm:$0xff]
      %v771 = vadd.f32 %v766, %v767
      %v772 = vadd.f32 %v771, %v768
      %v773 = vadd.f32 %v772, %v769
      %v774 = vadd.f32 %v770, %v773
      %775 = vst [vmem:[#allocation4] sm:$0xff] %v774
      %v776 = vld [vmem:[%s7] sm:$0x1]
      %v777 = vld [vmem:[%s7 + $0x1] sm:$0x1]
      %v778 = vld [vmem:[%s7 + $0x2] sm:$0x1]
      %v779 = vld [vmem:[%s7 + $0x3] sm:$0x1]
      %v780 = vld [vmem:[%s558] sm:$0xff]
      %v781 = vld [vmem:[%s558 + $0x8] sm:$0xff]
      %v782 = vld [vmem:[%s558 + $0x10] sm:$0xff]
      %v783 = vld [vmem:[%s558 + $0x18] sm:$0xff]
      %v784 = vld [vmem:[%s568] sm:$0xff]
      %v785 = vld [vmem:[%s568 + $0x8] sm:$0xff]
      %v786 = vld [vmem:[%s568 + $0x10] sm:$0xff]
      %v787 = vld [vmem:[%s568 + $0x18] sm:$0xff]
      %v792 = vlaneseq
      %v793 = vshrl.u32 %v792, 7
      %v794 = vsub.s32 0, %v793
      %v795 = vrot.slane %v776, %v794
      %v796 = vlaneseq
      %v797 = vshrl.u32 %v796, 7
      %v798 = vsub.s32 0, %v797
      %v799 = vrot.slane %v777, %v798
      %v800 = vlaneseq
      %v801 = vshrl.u32 %v800, 7
      %v802 = vsub.s32 0, %v801
      %v803 = vrot.slane %v778, %v802
      %v804 = vlaneseq
      %v805 = vshrl.u32 %v804, 7
      %v806 = vsub.s32 0, %v805
      %v807 = vrot.slane %v779, %v806
      %808 = vset.pattern.permute.xlu0 0
      %809 = vperm.xlu0 %808, %v795
      %v810 = vpop.permute.xlu0 %809
      %812 = vset.pattern.permute.xlu0 0
      %813 = vperm.xlu0 %812, %v799
      %v814 = vpop.permute.xlu0 %813
      %816 = vset.pattern.permute.xlu0 0
      %817 = vperm.xlu0 %816, %v803
      %v818 = vpop.permute.xlu0 %817
      %820 = vset.pattern.permute.xlu0 0
      %821 = vperm.xlu0 %820, %v807
      %v822 = vpop.permute.xlu0 %821
      %v824 = vmul.f32 %v784, %v810
      %v825 = vmul.f32 %v785, %v814
      %v826 = vmul.f32 %v786, %v818
      %v827 = vmul.f32 %v787, %v822
      %v828 = vsub.f32 %v780, %v824
      %v829 = vsub.f32 %v781, %v825
      %v830 = vsub.f32 %v782, %v826
      %v831 = vsub.f32 %v783, %v827
      %v832 = vand.u32 2147483647, %v828
      %v833 = vand.u32 2147483647, %v829
      %v834 = vand.u32 2147483647, %v830
      %v835 = vand.u32 2147483647, %v831
      %v836 = vmul.f32 %v832, %v664
      %v837 = vmul.f32 %v833, %v665
      %v838 = vmul.f32 %v834, %v666
      %v839 = vmul.f32 %v835, %v667
      %v840 = vld [vmem:[#allocation6] sm:$0xff]
      %v841 = vadd.f32 %v836, %v837
      %v842 = vadd.f32 %v841, %v838
      %v843 = vadd.f32 %v842, %v839
      %v844 = vadd.f32 %v840, %v843
      %845 = vst [vmem:[#allocation6] sm:$0xff] %v844
      // Predicated region
      $region57: #{sums_fn.1} parent=51 // pred_check
        %p846 = pneg %p577
      $region58: #{sums_fn.1} parent=51 // pred_check_branch
        %848 = sbr.rel (%p846) target = $region60
      $region59: #{sums_fn.1} parent=51 // pred_region
        %v849 = vlaneseq
        %v850 = vand.u32 %v849, 127
        %vm851 = vcmp.eq.s32.totalorder %v850, 0
        %v852 = vld [vmem:[#allocation2] sm:$0xff]
        %853 = vadd.xlane.f32.xlu0 %v852
        %v854 = vpop.xlane.xlu0 %853
        %v855 = vrot.slane %v854, 4
        %v856 = vadd.f32 %v854, %v855
        %v857 = vrot.slane %v856, 2
        %v858 = vadd.f32 %v856, %v857
        %v859 = vrot.slane %v858, 1
        %v860 = vadd.f32 %v858, %v859
        %s861 = vtos %v860
        %v862 = vstv %s861
        %v863 = vsel %vm851, %v862, 0.0
        %vm864 = vcmp.eq.s32.totalorder %v850, 1
        %v865 = vld [vmem:[#allocation3] sm:$0xff]
        %866 = vadd.xlane.f32.xlu0 %v865
        %v867 = vpop.xlane.xlu0 %866
        %v868 = vrot.slane %v867, 4
        %v869 = vadd.f32 %v867, %v868
        %v870 = vrot.slane %v869, 2
        %v871 = vadd.f32 %v869, %v870
        %v872 = vrot.slane %v871, 1
        %v873 = vadd.f32 %v871, %v872
        %s874 = vtos %v873
        %v875 = vstv %s874
        %v876 = vsel %vm864, %v875, 0.0
        %v877 = vadd.f32 %v863, %v876
        %vm878 = vcmp.eq.s32.totalorder %v850, 2
        %v879 = vld [vmem:[#allocation4] sm:$0xff]
        %880 = vadd.xlane.f32.xlu0 %v879
        %v881 = vpop.xlane.xlu0 %880
        %v882 = vrot.slane %v881, 4
        %v883 = vadd.f32 %v881, %v882
        %v884 = vrot.slane %v883, 2
        %v885 = vadd.f32 %v883, %v884
        %v886 = vrot.slane %v885, 1
        %v887 = vadd.f32 %v885, %v886
        %s888 = vtos %v887
        %v889 = vstv %s888
        %v890 = vsel %vm878, %v889, 0.0
        %v891 = vadd.f32 %v877, %v890
        %vm892 = vcmp.eq.s32.totalorder %v850, 3
        %v893 = vld [vmem:[#allocation5] sm:$0xff]
        %894 = vadd.xlane.f32.xlu0 %v893
        %v895 = vpop.xlane.xlu0 %894
        %v896 = vrot.slane %v895, 4
        %v897 = vadd.f32 %v895, %v896
        %v898 = vrot.slane %v897, 2
        %v899 = vadd.f32 %v897, %v898
        %v900 = vrot.slane %v899, 1
        %v901 = vadd.f32 %v899, %v900
        %s902 = vtos %v901
        %v903 = vstv %s902
        %v904 = vsel %vm892, %v903, 0.0
        %v905 = vadd.f32 %v891, %v904
        %vm906 = vcmp.eq.s32.totalorder %v850, 4
        %v907 = vld [vmem:[#allocation6] sm:$0xff]
        %908 = vadd.xlane.f32.xlu0 %v907
        %v909 = vpop.xlane.xlu0 %908
        %v910 = vrot.slane %v909, 4
        %v911 = vadd.f32 %v909, %v910
        %v912 = vrot.slane %v911, 2
        %v913 = vadd.f32 %v911, %v912
        %v914 = vrot.slane %v913, 1
        %v915 = vadd.f32 %v913, %v914
        %s916 = vtos %v915
        %v917 = vstv %s916
        %v918 = vsel %vm906, %v917, 0.0
        %v919 = vadd.f32 %v905, %v918
        %920 = vst [vmem:[%s576] sm:$0xff] %v919
      $region60: #{sums_fn.1} parent=51 // pred_fallthru
        _
      %p921 = scmp.lt.s32.totalorder %s24, 1
      %s922 = scalar_select %p921, %s24, 1
      %p923 = scmp.lt.s32.totalorder %s25, 0
      %s924 = scalar_select %p923, %s25, 0
      %s925 = sadd.s32 %s924, %s922
      %s926 = smul.addr %s925, 8
      %s927 = scalar_lea.vmem %s8, %s926
      // Predicated region
      $region61: #{sums_fn.1} parent=51 // pred_check
        %p928 = pneg %p289
      $region62: #{sums_fn.1} parent=51 // pred_check_branch
        %930 = sbr.rel (%p928) target = $region64
      $region63: #{sums_fn.1} parent=51 // pred_region
        _
      $region64: #{sums_fn.1} parent=51 // pred_fallthru
        _
    $region52: #{sums_fn.1} parent=5 // pred_fallthru
      _
    %p931 = scmp.le.s32.totalorder 2, %s14
    // Predicated region
    $region65: #{sums_fn.1} parent=5 // pred_check
      %p932 = pneg %p931
    $region66: #{sums_fn.1} parent=5 // pred_check_branch
      %934 = sbr.rel (%p932) target = $region68
    $region67: #{sums_fn.1} parent=5 // pred_region
      %s935 = ssub.s32 %s14, 2
      // Predicated region
      $region69: #{sums_fn.1} parent=67 // pred_check
        %p936 = pneg %p295
      $region70: #{sums_fn.1} parent=67 // pred_check_branch
        %938 = sbr.rel (%p936) target = $region72
      $region71: #{sums_fn.1} parent=67 // pred_region
        %p939 = scmp.lt.s32.totalorder %s27, 1
        %s940 = scalar_select %p939, %s27, 1
        %p941 = scmp.lt.s32.totalorder %s28, 0
        %s942 = scalar_select %p941, %s28, 0
        %s943 = sadd.s32 %s942, %s940
        %s944 = smul.addr %s943, 8
        %s945 = scalar_lea.vmem %s8, %s944
      $region72: #{sums_fn.1} parent=67 // pred_fallthru
        _
    $region68: #{sums_fn.1} parent=5 // pred_fallthru
      _
  $region6: #{sums_fn.1} parent=0 // loop_footer
    %s18 = sadd.s32 1, %s14
  $region7: #{sums_fn.1} parent=0 // loop_footer_branch
    %13 = sbr.rel target = $region3
  $region8: #{sums_fn.1} parent=0 // loop_exit
    _

</llo_original>
